<compile_context>
chip_gen: v7x
topology: tpu7x:2x2x1
jax: 0.10.0
libtpu: 0.0.40
codegen_flags: <defaults>
</compile_context>

<pallas_src>
import jax
import jax.numpy as jnp
from jax.experimental import pallas as pl
from jax.experimental.pallas import tpu as pltpu


def _round_up(x, m):
    return (x + m - 1) // m * m


def make_dqn_kernel(out_widths, bias_offsets):
    """out_widths[i]: stored output width of layer i (last layer lane-padded).
    bias_offsets[i]: lane-aligned start of layer i's bias inside the packed
    (1, total) bias buffer."""
    n_layers = len(out_widths)

    def kernel(x_ref, *refs):
        w_refs = refs[:n_layers]
        b_ref = refs[n_layers]
        out_ref = refs[n_layers + 1]

        # Activations travel as bf16 into the MXU; accumulation stays f32.
        h = x_ref[...].astype(jnp.bfloat16)
        for li in range(n_layers):
            w = w_refs[li][...]
            b = b_ref[:, bias_offsets[li]:bias_offsets[li] + out_widths[li]]
            y = jnp.dot(h, w, preferred_element_type=jnp.float32) + b
            if li < n_layers - 1:
                h = jnp.maximum(y, 0.0).astype(jnp.bfloat16)
            else:
                out_ref[...] = y.astype(out_ref.dtype)

    return kernel


def prepare_params(params_f32):
    """params_f32: list of (W (in,out) f32, b (out,) f32), PyTorch-equivalent.

    Returns bf16 weights (last layer lane-padded to 128), a packed lane-aligned
    f32 bias buffer of shape (1, total), per-layer stored widths & bias offsets,
    and the true output size."""
    out_size = params_f32[-1][0].shape[1]
    weights, bias_chunks, offsets, widths = [], [], [], []
    off = 0
    n = len(params_f32)
    for li, (w, b) in enumerate(params_f32):
        if li == n - 1:  # pad output head to a full 128-lane tile
            pad = _round_up(w.shape[1], 128) - w.shape[1]
            if pad:
                w = jnp.pad(w, ((0, 0), (0, pad)))
                b = jnp.pad(b, ((0, pad),))
        fout = w.shape[1]
        weights.append(w.astype(jnp.bfloat16))
        seg = _round_up(fout, 128)
        bias_chunks.append(jnp.pad(b, ((0, seg - fout),)).astype(jnp.float32))
        offsets.append(off)
        widths.append(fout)
        off += seg
    bias_packed = jnp.concatenate(bias_chunks)[None, :]  # (1, total), lane-aligned
    return weights, bias_packed, tuple(widths), tuple(offsets), out_size


def dqn_forward(x, weights, bias_packed, widths, offsets, out_size, tile_b=128):
    """x: (B, input_size) float32. Returns (B, out_size) float32."""
    B, fin = x.shape
    out_pad = weights[-1].shape[1]

    # Pad batch up to the tile so the grid is exact; weights stay resident
    # across all batch tiles (constant block index).
    Bp = _round_up(max(B, 1), tile_b)
    if Bp != B:
        x = jnp.pad(x, ((0, Bp - B), (0, 0)))
    grid = (Bp // tile_b,)

    kernel = make_dqn_kernel(widths, offsets)

    flops = 2 * Bp * sum(w.shape[0] * w.shape[1] for w in weights)
    bytes_accessed = (sum(w.size * w.dtype.itemsize for w in weights)
                      + bias_packed.size * 4
                      + Bp * (fin + out_pad) * 4)

    in_specs = [pl.BlockSpec((tile_b, fin), lambda i: (i, 0))]
    in_specs += [pl.BlockSpec(w.shape, lambda i: (0, 0)) for w in weights]
    in_specs += [pl.BlockSpec(bias_packed.shape, lambda i: (0, 0))]

    out = pl.pallas_call(
        kernel,
        out_shape=jax.ShapeDtypeStruct((Bp, out_pad), jnp.float32),
        grid=grid,
        in_specs=in_specs,
        out_specs=pl.BlockSpec((tile_b, out_pad), lambda i: (i, 0)),
        compiler_params=pltpu.CompilerParams(
            dimension_semantics=("parallel",)),   # v7x: shard batch over 2 TCs
        cost_estimate=pl.CostEstimate(flops=flops, transcendentals=0,
                                      bytes_accessed=bytes_accessed),
    )(x, *weights, bias_packed)

    return out[:B, :out_size]


def init_linear(key, in_features, out_features):
    """PyTorch nn.Linear default init: U(-1/sqrt(in), 1/sqrt(in)).
    Stored as (in, out) so the kernel computes x @ W == PyTorch x @ W.T."""
    kw, kb = jax.random.split(key)
    bound = 1.0 / jnp.sqrt(jnp.float32(in_features))
    w = jax.random.uniform(kw, (in_features, out_features), jnp.float32,
                           minval=-bound, maxval=bound)
    b = jax.random.uniform(kb, (out_features,), jnp.float32,
                           minval=-bound, maxval=bound)
    return w, b


def reference_forward(x, weights, bias_packed, widths, offsets, out_size):
    """Pure-JAX reference using the same bf16 weights / f32 accumulation."""
    h = x
    for li, w in enumerate(weights):
        b = bias_packed[:, offsets[li]:offsets[li] + widths[li]]
        y = jnp.dot(h.astype(jnp.bfloat16), w,
                    preferred_element_type=jnp.float32) + b
        h = jnp.maximum(y, 0.0) if li < len(weights) - 1 else y
    return h[:, :out_size]


if __name__ == "__main__":
    key = jax.random.PRNGKey(0)

    batch = 200              # not a multiple of 128 -> exercises batch padding
    input_size = 32
    output_size = 4

    layer_dims = [(input_size, 256), (256, 256), (256, 128), (128, 64),
                  (64, output_size)]

    keys = jax.random.split(key, len(layer_dims) + 1)
    params_f32 = [init_linear(keys[i], fin, fout)
                  for i, (fin, fout) in enumerate(layer_dims)]
    weights, bias_packed, widths, offsets, out_size = prepare_params(params_f32)

    x = jax.random.normal(keys[-1], (batch, input_size), jnp.float32)

    out = dqn_forward(x, weights, bias_packed, widths, offsets, out_size)
    out = jax.block_until_ready(out)

    # sanity check against a bf16-weight pure-JAX reference
    ref = reference_forward(x, weights, bias_packed, widths, offsets, out_size)
    assert out.shape == (batch, output_size)
    assert jnp.allclose(out, ref, atol=1e-2, rtol=1e-2)

    # TODO(synk): nn.Dropout(0.05) is treated as identity (inference mode);
    # training-mode RNG masking is intentionally not implemented.
    print("KERNEL_OK")
</pallas_src>

<mosaic_0001>
module attributes {stable_mosaic.version = 11 : i64} {
  func.func @kernel(%arg0: i32, %arg1: memref<128x32xf32, #tpu.memory_space<vmem>>, %arg2: memref<32x256xbf16, #tpu.memory_space<vmem>>, %arg3: memref<256x256xbf16, #tpu.memory_space<vmem>>, %arg4: memref<256x128xbf16, #tpu.memory_space<vmem>>, %arg5: memref<128x64xbf16, #tpu.memory_space<vmem>>, %arg6: memref<64x128xbf16, #tpu.memory_space<vmem>>, %arg7: memref<1x896xf32, #tpu.memory_space<vmem>>, %arg8: memref<128x128xf32, #tpu.memory_space<vmem>>) attributes {dimension_semantics = [#tpu.dimension_semantics<parallel>], iteration_bounds = array<i64: 2>, scalar_prefetch = 0 : i64, scratch_operands = 0 : i64, tpu.core_type = #tpu.core_type<tc>, window_params = [{transform_indices = @transform_0, window_bounds = array<i64: 128, 32>}, {pipeline_mode = #tpu.pipeline_mode<synchronous>, transform_indices = @transform_1, window_bounds = array<i64: 32, 256>}, {pipeline_mode = #tpu.pipeline_mode<synchronous>, transform_indices = @transform_2, window_bounds = array<i64: 256, 256>}, {pipeline_mode = #tpu.pipeline_mode<synchronous>, transform_indices = @transform_3, window_bounds = array<i64: 256, 128>}, {pipeline_mode = #tpu.pipeline_mode<synchronous>, transform_indices = @transform_4, window_bounds = array<i64: 128, 64>}, {pipeline_mode = #tpu.pipeline_mode<synchronous>, transform_indices = @transform_5, window_bounds = array<i64: 64, 128>}, {pipeline_mode = #tpu.pipeline_mode<synchronous>, transform_indices = @transform_6, window_bounds = array<i64: 1, 896>}, {transform_indices = @transform_7, window_bounds = array<i64: 128, 128>}]} {
    %c0 = arith.constant 0 : index
    %c0_0 = arith.constant 0 : index
    %0 = vector.load %arg1[%c0, %c0_0] : memref<128x32xf32, #tpu.memory_space<vmem>>, vector<128x32xf32>
    %1 = arith.truncf %0 : vector<128x32xf32> to vector<128x32xbf16>
    %c0_1 = arith.constant 0 : index
    %c0_2 = arith.constant 0 : index
    %2 = vector.load %arg2[%c0_1, %c0_2] : memref<32x256xbf16, #tpu.memory_space<vmem>>, vector<32x256xbf16>
    %c0_3 = arith.constant 0 : index
    %c0_4 = arith.constant 0 : index
    %3 = vector.load %arg7[%c0_3, %c0_4] : memref<1x896xf32, #tpu.memory_space<vmem>>, vector<1x256xf32>
    %cst = arith.constant dense<0.000000e+00> : vector<128x256xf32>
    %4 = tpu.matmul %1, %2, %cst {dimension_numbers = #tpu.dot_dimension_numbers<[1], [0], [0], [1], [0, 0, 1, 1], [], []>} : vector<128x32xbf16>, vector<32x256xbf16>, vector<128x256xf32> -> vector<128x256xf32>
    %5 = vector.broadcast %3 : vector<1x256xf32> to vector<128x256xf32>
    %6 = arith.addf %4, %5 : vector<128x256xf32>
    %cst_5 = arith.constant 0.000000e+00 : f32
    %7 = vector.broadcast %cst_5 : f32 to vector<128x256xf32>
    %8 = arith.maximumf %6, %7 : vector<128x256xf32>
    %9 = arith.truncf %8 : vector<128x256xf32> to vector<128x256xbf16>
    %c0_6 = arith.constant 0 : index
    %c0_7 = arith.constant 0 : index
    %10 = vector.load %arg3[%c0_6, %c0_7] : memref<256x256xbf16, #tpu.memory_space<vmem>>, vector<256x256xbf16>
    %c0_8 = arith.constant 0 : index
    %c256 = arith.constant 256 : index
    %11 = vector.load %arg7[%c0_8, %c256] : memref<1x896xf32, #tpu.memory_space<vmem>>, vector<1x256xf32>
    %cst_9 = arith.constant dense<0.000000e+00> : vector<128x256xf32>
    %12 = tpu.matmul %9, %10, %cst_9 {dimension_numbers = #tpu.dot_dimension_numbers<[1], [0], [0], [1], [0, 0, 1, 1], [], []>} : vector<128x256xbf16>, vector<256x256xbf16>, vector<128x256xf32> -> vector<128x256xf32>
    %13 = vector.broadcast %11 : vector<1x256xf32> to vector<128x256xf32>
    %14 = arith.addf %12, %13 : vector<128x256xf32>
    %cst_10 = arith.constant 0.000000e+00 : f32
    %15 = vector.broadcast %cst_10 : f32 to vector<128x256xf32>
    %16 = arith.maximumf %14, %15 : vector<128x256xf32>
    %17 = arith.truncf %16 : vector<128x256xf32> to vector<128x256xbf16>
    %c0_11 = arith.constant 0 : index
    %c0_12 = arith.constant 0 : index
    %18 = vector.load %arg4[%c0_11, %c0_12] : memref<256x128xbf16, #tpu.memory_space<vmem>>, vector<256x128xbf16>
    %c0_13 = arith.constant 0 : index
    %c512 = arith.constant 512 : index
    %19 = vector.load %arg7[%c0_13, %c512] : memref<1x896xf32, #tpu.memory_space<vmem>>, vector<1x128xf32>
    %cst_14 = arith.constant dense<0.000000e+00> : vector<128x128xf32>
    %20 = tpu.matmul %17, %18, %cst_14 {dimension_numbers = #tpu.dot_dimension_numbers<[1], [0], [0], [1], [0, 0, 1, 1], [], []>} : vector<128x256xbf16>, vector<256x128xbf16>, vector<128x128xf32> -> vector<128x128xf32>
    %21 = vector.broadcast %19 : vector<1x128xf32> to vector<128x128xf32>
    %22 = arith.addf %20, %21 : vector<128x128xf32>
    %cst_15 = arith.constant 0.000000e+00 : f32
    %23 = vector.broadcast %cst_15 : f32 to vector<128x128xf32>
    %24 = arith.maximumf %22, %23 : vector<128x128xf32>
    %25 = arith.truncf %24 : vector<128x128xf32> to vector<128x128xbf16>
    %c0_16 = arith.constant 0 : index
    %c0_17 = arith.constant 0 : index
    %26 = vector.load %arg5[%c0_16, %c0_17] : memref<128x64xbf16, #tpu.memory_space<vmem>>, vector<128x64xbf16>
    %c0_18 = arith.constant 0 : index
    %c640 = arith.constant 640 : index
    %27 = vector.load %arg7[%c0_18, %c640] : memref<1x896xf32, #tpu.memory_space<vmem>>, vector<1x64xf32>
    %cst_19 = arith.constant dense<0.000000e+00> : vector<128x64xf32>
    %28 = tpu.matmul %25, %26, %cst_19 {dimension_numbers = #tpu.dot_dimension_numbers<[1], [0], [0], [1], [0, 0, 1, 1], [], []>} : vector<128x128xbf16>, vector<128x64xbf16>, vector<128x64xf32> -> vector<128x64xf32>
    %29 = vector.broadcast %27 : vector<1x64xf32> to vector<128x64xf32>
    %30 = arith.addf %28, %29 : vector<128x64xf32>
    %cst_20 = arith.constant 0.000000e+00 : f32
    %31 = vector.broadcast %cst_20 : f32 to vector<128x64xf32>
    %32 = arith.maximumf %30, %31 : vector<128x64xf32>
    %33 = arith.truncf %32 : vector<128x64xf32> to vector<128x64xbf16>
    %c0_21 = arith.constant 0 : index
    %c0_22 = arith.constant 0 : index
    %34 = vector.load %arg6[%c0_21, %c0_22] : memref<64x128xbf16, #tpu.memory_space<vmem>>, vector<64x128xbf16>
    %c0_23 = arith.constant 0 : index
    %c768 = arith.constant 768 : index
    %35 = vector.load %arg7[%c0_23, %c768] : memref<1x896xf32, #tpu.memory_space<vmem>>, vector<1x128xf32>
    %cst_24 = arith.constant dense<0.000000e+00> : vector<128x128xf32>
    %36 = tpu.matmul %33, %34, %cst_24 {dimension_numbers = #tpu.dot_dimension_numbers<[1], [0], [0], [1], [0, 0, 1, 1], [], []>} : vector<128x64xbf16>, vector<64x128xbf16>, vector<128x128xf32> -> vector<128x128xf32>
    %37 = vector.broadcast %35 : vector<1x128xf32> to vector<128x128xf32>
    %38 = arith.addf %36, %37 : vector<128x128xf32>
    %c0_25 = arith.constant 0 : index
    %c0_26 = arith.constant 0 : index
    %39 = vector.load %arg8[%c0_25, %c0_26] : memref<128x128xf32, #tpu.memory_space<vmem>>, vector<128x128xf32>
    tpu.vector_store %arg8[%c0_25, %c0_26], %38 {strides = array<i32>} : memref<128x128xf32, #tpu.memory_space<vmem>>, vector<128x128xf32>,
    return
  }
  func.func @transform_0(%arg0: i32) -> (i32, i32) {
    %c0_i32 = arith.constant 0 : i32
    %c0_i32_0 = arith.constant 0 : i32
    return %arg0, %c0_i32 : i32, i32
  }
  func.func @transform_1(%arg0: i32) -> (i32, i32) {
    %c0_i32 = arith.constant 0 : i32
    %c0_i32_0 = arith.constant 0 : i32
    %c0_i32_1 = arith.constant 0 : i32
    return %c0_i32, %c0_i32_0 : i32, i32
  }
  func.func @transform_2(%arg0: i32) -> (i32, i32) {
    %c0_i32 = arith.constant 0 : i32
    %c0_i32_0 = arith.constant 0 : i32
    %c0_i32_1 = arith.constant 0 : i32
    return %c0_i32, %c0_i32_0 : i32, i32
  }
  func.func @transform_3(%arg0: i32) -> (i32, i32) {
    %c0_i32 = arith.constant 0 : i32
    %c0_i32_0 = arith.constant 0 : i32
    %c0_i32_1 = arith.constant 0 : i32
    return %c0_i32, %c0_i32_0 : i32, i32
  }
  func.func @transform_4(%arg0: i32) -> (i32, i32) {
    %c0_i32 = arith.constant 0 : i32
    %c0_i32_0 = arith.constant 0 : i32
    %c0_i32_1 = arith.constant 0 : i32
    return %c0_i32, %c0_i32_0 : i32, i32
  }
  func.func @transform_5(%arg0: i32) -> (i32, i32) {
    %c0_i32 = arith.constant 0 : i32
    %c0_i32_0 = arith.constant 0 : i32
    %c0_i32_1 = arith.constant 0 : i32
    return %c0_i32, %c0_i32_0 : i32, i32
  }
  func.func @transform_6(%arg0: i32) -> (i32, i32) {
    %c0_i32 = arith.constant 0 : i32
    %c0_i32_0 = arith.constant 0 : i32
    %c0_i32_1 = arith.constant 0 : i32
    return %c0_i32, %c0_i32_0 : i32, i32
  }
  func.func @transform_7(%arg0: i32) -> (i32, i32) {
    %c0_i32 = arith.constant 0 : i32
    %c0_i32_0 = arith.constant 0 : i32
    return %arg0, %c0_i32 : i32, i32
  }
}

</mosaic_0001>

<llo_original>
// kernel: tpu_custom_call.1
$region0: #{tpu_custom_call.1}
  #allocation0 [shape = 'u32[]', space=smem, size = 0x4, offset = 0x4, fixed_abs, tag = 'smem constant byte address 0x4 - core index']
  #allocation1 [shape = 'u32[144,128]{1,0:T(1,128)}', space=vmem, size = 0x12000, scoped, tag = 'internal scratch']
  %s0 = inlined_call_operand.vmem [shape: f32[256,32], index: 0, kind: input, shape index: {}]
  %s1 = inlined_call_operand.vmem [shape: bf16[32,256], index: 1, kind: input, shape index: {}]
  %s2 = inlined_call_operand.vmem [shape: bf16[256,256], index: 2, kind: input, shape index: {}]
  %s3 = inlined_call_operand.vmem [shape: bf16[256,128], index: 3, kind: input, shape index: {}]
  %s4 = inlined_call_operand.vmem [shape: bf16[128,64], index: 4, kind: input, shape index: {}]
  %s5 = inlined_call_operand.hbm [shape: bf16[64,128], index: 5, kind: input, shape index: {}]
  %s6 = inlined_call_operand.vmem [shape: f32[1,896], index: 6, kind: input, shape index: {}]
  %s7 = inlined_call_operand.hbm [shape: f32[256,128], index: 7, kind: output, shape index: {}]
  %s8 = sld [smem:[#allocation0]]
  $region65: #{tpu_custom_call.1} parent=0
    _
  %s10 = ssub.s32 1, %s8
  %s11 = scalar_select 0, %s10, %s8
  $region1: #{tpu_custom_call.1} parent=0
    #allocation2 [shape = 'u8[16384]{0}', space=vmem, size = 0x4000, scoped, tag = 'input window, operand 5, single buffered']
    #allocation3 [shape = 's32[2]{0}', space=sflag, size = 0x8, scoped, tag = 'scoped memory for tpu_custom_call.1']
    #allocation4 [shape = 's32[2]{0}', space=sflag, size = 0x8, scoped, tag = 'scoped memory for tpu_custom_call.1']
    #allocation5 [shape = 'u8[131072]{0}', space=vmem, size = 0x20000, scoped, tag = 'output window, operand 0']
    %12 = vsyncpa [#allocation3], 0
    %13 = vsyncpa [#allocation4], 0
    %s14 = scalar_lea.sflag [#allocation4], 1
    %15 = vsyncpa %s14, 0
    loop: start=0, step=1, limit=4
    $region2: #{tpu_custom_call.1} parent=1 // loop_pre_header
      _
    $region3: #{tpu_custom_call.1} parent=1 // loop_header
      %s17 = sphi 0, %s21
      %p18 = scmp.ge.s32.totalorder %s17, 4
      %s27 = sphi 0, %s29
      %s30 = sphi 0, %s27
      %s31 = sphi 0, %s30
      %s47 = sphi 0, %s31
      %s51 = sphi 0, %s51
      %s53 = sphi 0, %s51
      %s54 = sphi 0, %s53
      %s68 = sphi 0, %s54
      %s72 = sphi 0, %s72
      %s74 = sphi 0, %s72
      %s75 = sphi 0, %s74
      %s89 = sphi 0, %s75
      %s93 = sphi 0, %s93
      %s95 = sphi 0, %s93
      %s96 = sphi 0, %s95
      %s110 = sphi 0, %s96
      %s114 = sphi 0, %s114
      %s116 = sphi 0, %s114
      %s117 = sphi 0, %s116
      %s131 = sphi 0, %s117
      %s135 = sphi 0, %s135
      %s137 = sphi 0, %s135
      %s138 = sphi 0, %s137
      %s152 = sphi 0, %s138
      %s156 = sphi 0, %s156
      %s158 = sphi 0, %s156
      %s159 = sphi 0, %s158
      %s173 = sphi 0, %s159
      %s179 = sphi 0, %s181
      %s182 = sphi 0, %s179
      %s183 = sphi 0, %s182
      %s199 = sphi 0, %s183
    $region4: #{tpu_custom_call.1} parent=1 // loop_header_branch
      %20 = sbr.rel (%p18) target = $region8
    $region5: #{tpu_custom_call.1} parent=1 // loop_body
      %s22 = ssub.s32 %s17, 1
      %s23 = ssub.s32 %s17, 2
      %s24 = sadd.s32 %s17, 1
      %s25 = ssub.s32 %s17, %s24
      %p26 = scmp.eq.s32.totalorder %s25, 0
      %s28 = sadd.s32 %s27, 1
      %s29 = scalar_select %p26, %s27, %s28
      %p32 = pneg %p26
      %p33 = scmp.eq.s32.totalorder %s17, 1
      %p34 = por %p32, %p33
      %p35 = scmp.ne.s32.totalorder %s27, %s30
      %p36 = scmp.eq.s32.totalorder %s17, 0
      %p37 = por %p35, %p36
      %p38 = scmp.ne.s32.totalorder %s27, %s30
      %p39 = scmp.eq.s32.totalorder %s22, 1
      %p40 = por %p38, %p39
      %p41 = scmp.ne.s32.totalorder %s30, %s31
      %p42 = scmp.eq.s32.totalorder %s22, 0
      %p43 = por %p41, %p42
      %p44 = scmp.ne.s32.totalorder %s30, %s31
      %p45 = scmp.eq.s32.totalorder %s23, 1
      %p46 = por %p44, %p45
      %p48 = scmp.ne.s32.totalorder %s31, %s47
      %p49 = scmp.eq.s32.totalorder %s23, 0
      %p50 = por %p48, %p49
      %s52 = sadd.s32 %s51, 1
      %p55 = scmp.eq.s32.totalorder %s17, 1
      %p56 = scmp.ne.s32.totalorder %s51, %s53
      %p57 = scmp.eq.s32.totalorder %s17, 0
      %p58 = por %p56, %p57
      %p59 = scmp.ne.s32.totalorder %s51, %s53
      %p60 = scmp.eq.s32.totalorder %s22, 1
      %p61 = por %p59, %p60
      %p62 = scmp.ne.s32.totalorder %s53, %s54
      %p63 = scmp.eq.s32.totalorder %s22, 0
      %p64 = por %p62, %p63
      %p65 = scmp.ne.s32.totalorder %s53, %s54
      %p66 = scmp.eq.s32.totalorder %s23, 1
      %p67 = por %p65, %p66
      %p69 = scmp.ne.s32.totalorder %s54, %s68
      %p70 = scmp.eq.s32.totalorder %s23, 0
      %p71 = por %p69, %p70
      %s73 = sadd.s32 %s72, 1
      %p76 = scmp.eq.s32.totalorder %s17, 1
      %p77 = scmp.ne.s32.totalorder %s72, %s74
      %p78 = scmp.eq.s32.totalorder %s17, 0
      %p79 = por %p77, %p78
      %p80 = scmp.ne.s32.totalorder %s72, %s74
      %p81 = scmp.eq.s32.totalorder %s22, 1
      %p82 = por %p80, %p81
      %p83 = scmp.ne.s32.totalorder %s74, %s75
      %p84 = scmp.eq.s32.totalorder %s22, 0
      %p85 = por %p83, %p84
      %p86 = scmp.ne.s32.totalorder %s74, %s75
      %p87 = scmp.eq.s32.totalorder %s23, 1
      %p88 = por %p86, %p87
      %p90 = scmp.ne.s32.totalorder %s75, %s89
      %p91 = scmp.eq.s32.totalorder %s23, 0
      %p92 = por %p90, %p91
      %s94 = sadd.s32 %s93, 1
      %p97 = scmp.eq.s32.totalorder %s17, 1
      %p98 = scmp.ne.s32.totalorder %s93, %s95
      %p99 = scmp.eq.s32.totalorder %s17, 0
      %p100 = por %p98, %p99
      %p101 = scmp.ne.s32.totalorder %s93, %s95
      %p102 = scmp.eq.s32.totalorder %s22, 1
      %p103 = por %p101, %p102
      %p104 = scmp.ne.s32.totalorder %s95, %s96
      %p105 = scmp.eq.s32.totalorder %s22, 0
      %p106 = por %p104, %p105
      %p107 = scmp.ne.s32.totalorder %s95, %s96
      %p108 = scmp.eq.s32.totalorder %s23, 1
      %p109 = por %p107, %p108
      %p111 = scmp.ne.s32.totalorder %s96, %s110
      %p112 = scmp.eq.s32.totalorder %s23, 0
      %p113 = por %p111, %p112
      %s115 = sadd.s32 %s114, 1
      %p118 = scmp.eq.s32.totalorder %s17, 1
      %p119 = scmp.ne.s32.totalorder %s114, %s116
      %p120 = scmp.eq.s32.totalorder %s17, 0
      %p121 = por %p119, %p120
      %p122 = scmp.ne.s32.totalorder %s114, %s116
      %p123 = scmp.eq.s32.totalorder %s22, 1
      %p124 = por %p122, %p123
      %p125 = scmp.ne.s32.totalorder %s116, %s117
      %p126 = scmp.eq.s32.totalorder %s22, 0
      %p127 = por %p125, %p126
      %p128 = scmp.ne.s32.totalorder %s116, %s117
      %p129 = scmp.eq.s32.totalorder %s23, 1
      %p130 = por %p128, %p129
      %p132 = scmp.ne.s32.totalorder %s117, %s131
      %p133 = scmp.eq.s32.totalorder %s23, 0
      %p134 = por %p132, %p133
      %s136 = sadd.s32 %s135, 1
      %p139 = scmp.eq.s32.totalorder %s17, 1
      %p140 = scmp.ne.s32.totalorder %s135, %s137
      %p141 = scmp.eq.s32.totalorder %s17, 0
      %p142 = por %p140, %p141
      %p143 = scmp.ne.s32.totalorder %s135, %s137
      %p144 = scmp.eq.s32.totalorder %s22, 1
      %p145 = por %p143, %p144
      %p146 = scmp.ne.s32.totalorder %s137, %s138
      %p147 = scmp.eq.s32.totalorder %s22, 0
      %p148 = por %p146, %p147
      %p149 = scmp.ne.s32.totalorder %s137, %s138
      %p150 = scmp.eq.s32.totalorder %s23, 1
      %p151 = por %p149, %p150
      %p153 = scmp.ne.s32.totalorder %s138, %s152
      %p154 = scmp.eq.s32.totalorder %s23, 0
      %p155 = por %p153, %p154
      %s157 = sadd.s32 %s156, 1
      %p160 = scmp.eq.s32.totalorder %s17, 1
      %p161 = scmp.ne.s32.totalorder %s156, %s158
      %p162 = scmp.eq.s32.totalorder %s17, 0
      %p163 = por %p161, %p162
      %p164 = scmp.ne.s32.totalorder %s156, %s158
      %p165 = scmp.eq.s32.totalorder %s22, 1
      %p166 = por %p164, %p165
      %p167 = scmp.ne.s32.totalorder %s158, %s159
      %p168 = scmp.eq.s32.totalorder %s22, 0
      %p169 = por %p167, %p168
      %p170 = scmp.ne.s32.totalorder %s158, %s159
      %p171 = scmp.eq.s32.totalorder %s23, 1
      %p172 = por %p170, %p171
      %p174 = scmp.ne.s32.totalorder %s159, %s173
      %p175 = scmp.eq.s32.totalorder %s23, 0
      %p176 = por %p174, %p175
      %s177 = ssub.s32 %s17, %s24
      %p178 = scmp.eq.s32.totalorder %s177, 0
      %s180 = sadd.s32 %s179, 1
      %s181 = scalar_select %p178, %s179, %s180
      %p184 = pneg %p178
      %p185 = scmp.eq.s32.totalorder %s17, 1
      %p186 = por %p184, %p185
      %p187 = scmp.ne.s32.totalorder %s179, %s182
      %p188 = scmp.eq.s32.totalorder %s17, 0
      %p189 = por %p187, %p188
      %p190 = scmp.ne.s32.totalorder %s179, %s182
      %p191 = scmp.eq.s32.totalorder %s22, 1
      %p192 = por %p190, %p191
      %p193 = scmp.ne.s32.totalorder %s182, %s183
      %p194 = scmp.eq.s32.totalorder %s22, 0
      %p195 = por %p193, %p194
      %p196 = scmp.ne.s32.totalorder %s182, %s183
      %p197 = scmp.eq.s32.totalorder %s23, 1
      %p198 = por %p196, %p197
      %p200 = scmp.ne.s32.totalorder %s183, %s199
      %p201 = scmp.eq.s32.totalorder %s23, 0
      %p202 = por %p200, %p201
      %p203 = scmp.le.s32.totalorder 1, %s17
      %p204 = scmp.lt.s32.totalorder %s17, 3
      %p205 = pnand %p203, %p204
      %p206 = pneg %p205
      // Predicated region
      $region9: #{tpu_custom_call.1} parent=5 // pred_check
        _
      $region10: #{tpu_custom_call.1} parent=5 // pred_check_branch
        %208 = sbr.rel (%p205) target = $region12
      $region11: #{tpu_custom_call.1} parent=5 // pred_region
        %s209 = ssub.s32 %s17, 1
        // Predicated region
        $region13: #{tpu_custom_call.1} parent=11 // pred_check
          %p210 = pneg %p64
        $region14: #{tpu_custom_call.1} parent=11 // pred_check_branch
          %212 = sbr.rel (%p210) target = $region16
        $region15: #{tpu_custom_call.1} parent=11 // pred_region
          _
        $region16: #{tpu_custom_call.1} parent=11 // pred_fallthru
          _
        // Predicated region
        $region17: #{tpu_custom_call.1} parent=11 // pred_check
          %p213 = pneg %p85
        $region18: #{tpu_custom_call.1} parent=11 // pred_check_branch
          %215 = sbr.rel (%p213) target = $region20
        $region19: #{tpu_custom_call.1} parent=11 // pred_region
          _
        $region20: #{tpu_custom_call.1} parent=11 // pred_fallthru
          _
        // Predicated region
        $region21: #{tpu_custom_call.1} parent=11 // pred_check
          %p216 = pneg %p106
        $region22: #{tpu_custom_call.1} parent=11 // pred_check_branch
          %218 = sbr.rel (%p216) target = $region24
        $region23: #{tpu_custom_call.1} parent=11 // pred_region
          _
        $region24: #{tpu_custom_call.1} parent=11 // pred_fallthru
          _
        // Predicated region
        $region25: #{tpu_custom_call.1} parent=11 // pred_check
          %p219 = pneg %p127
        $region26: #{tpu_custom_call.1} parent=11 // pred_check_branch
          %221 = sbr.rel (%p219) target = $region28
        $region27: #{tpu_custom_call.1} parent=11 // pred_region
          _
        $region28: #{tpu_custom_call.1} parent=11 // pred_fallthru
          _
        // Predicated region
        $region29: #{tpu_custom_call.1} parent=11 // pred_check
          %p222 = pneg %p148
        $region30: #{tpu_custom_call.1} parent=11 // pred_check_branch
          %224 = sbr.rel (%p222) target = $region32
        $region31: #{tpu_custom_call.1} parent=11 // pred_region
          %s226 = ssub.s32 512, 512
          %227 = vsyncadd [#allocation3], %s226
          %s228 = sshll.u32 [#allocation2], 4
          %s229 = int_to_ptr.vmem [resolvable:$true] %s228
          %234 = dma.hbm_to_vmem [thread:$0]  %s5, 512, %s229, [#allocation3], 64, 64, 4
        $region32: #{tpu_custom_call.1} parent=11 // pred_fallthru
          _
        // Predicated region
        $region33: #{tpu_custom_call.1} parent=11 // pred_check
          %p235 = pneg %p169
        $region34: #{tpu_custom_call.1} parent=11 // pred_check_branch
          %237 = sbr.rel (%p235) target = $region36
        $region35: #{tpu_custom_call.1} parent=11 // pred_region
          _
        $region36: #{tpu_custom_call.1} parent=11 // pred_fallthru
          _
      $region12: #{tpu_custom_call.1} parent=5 // pred_fallthru
        _
      %p238 = scmp.lt.s32.totalorder %s17, 2
      // Predicated region
      $region37: #{tpu_custom_call.1} parent=5 // pred_check
        %p239 = pneg %p238
      $region38: #{tpu_custom_call.1} parent=5 // pred_check_branch
        %241 = sbr.rel (%p239) target = $region40
      $region39: #{tpu_custom_call.1} parent=5 // pred_region
        // Predicated region
        $region41: #{tpu_custom_call.1} parent=39 // pred_check
          %p242 = pneg %p37
        $region42: #{tpu_custom_call.1} parent=39 // pred_check_branch
          %244 = sbr.rel (%p242) target = $region44
        $region43: #{tpu_custom_call.1} parent=39 // pred_region
          %s245 = smul.u32 16, %s17
          %p246 = scmp.lt.s32.totalorder %s245, 31
          %s247 = scalar_select %p246, %s245, 31
          %s248 = smul.addr %s247, 8
          %s249 = scalar_lea.vmem %s0, %s248
          %s250 = smul.u32 16, %s17
        $region44: #{tpu_custom_call.1} parent=39 // pred_fallthru
          _
      $region40: #{tpu_custom_call.1} parent=5 // pred_fallthru
        _
      %p251 = scmp.le.s32.totalorder 1, %s17
      %p252 = scmp.lt.s32.totalorder %s17, 3
      %p253 = pnand %p251, %p252
      %p254 = pneg %p253
      // Predicated region
      $region45: #{tpu_custom_call.1} parent=5 // pred_check
        _
      $region46: #{tpu_custom_call.1} parent=5 // pred_check_branch
        %256 = sbr.rel (%p253) target = $region48
      $region47: #{tpu_custom_call.1} parent=5 // pred_region
        %s257 = ssub.s32 %s17, 1
        // Predicated region
        $region49: #{tpu_custom_call.1} parent=47 // pred_check
          %p258 = pneg %p148
        $region50: #{tpu_custom_call.1} parent=47 // pred_check_branch
          %260 = sbr.rel (%p258) target = $region52
        $region51: #{tpu_custom_call.1} parent=47 // pred_region
          %261 = dma.done [#allocation3], 512
        $region52: #{tpu_custom_call.1} parent=47 // pred_fallthru
          _
        %s262 = smul.u32 16, %s22
        %p263 = scmp.lt.s32.totalorder %s262, 31
        %s264 = scalar_select %p263, %s262, 31
        %s265 = smul.addr %s264, 8
        %s266 = scalar_lea.vmem %s0, %s265
        %p267 = pneg %p43
        %p268 = pneg %p40
        %p269 = pneg %p64
        %p270 = pneg %p61
        %p271 = pneg %p85
        %p272 = pneg %p82
        %p273 = pneg %p106
        %p274 = pneg %p103
        %p275 = pneg %p127
        %p276 = pneg %p124
        %p277 = pneg %p148
        %p278 = pneg %p145
        %p279 = pneg %p169
        %p280 = pneg %p166
        %p281 = pneg %p195
        %p282 = pneg %p192
        %s283 = sand.u32 %s182, 1
        %s284 = scalar_lea.sflag [#allocation4], %s283
        %s285 = sand.u32 %s182, 1
        %s286 = smul.addr %s285, 128
        %s287 = scalar_lea.vmem [#allocation5], %s286
        %s288 = smul.u32 16, %s22
        %p289 = scmp.lt.s32.totalorder %s288, 31
        %s290 = scalar_select %p289, %s288, 31
        %s291 = smul.addr %s290, 8
        %s292 = scalar_lea.vmem %s0, %s291
        %s293 = smul.u32 16, %s22
        %s294 = smul.u32 16, %s22
        %v296 = vld [vmem:[%s292] sm:$0xff]
        %v297 = vld [vmem:[%s292 + $0x8] sm:$0xff]
        %v298 = vld [vmem:[%s292 + $0x10] sm:$0xff]
        %v299 = vld [vmem:[%s292 + $0x18] sm:$0xff]
        %v300 = vld [vmem:[%s292 + $0x20] sm:$0xff]
        %v301 = vld [vmem:[%s292 + $0x28] sm:$0xff]
        %v302 = vld [vmem:[%s292 + $0x30] sm:$0xff]
        %v303 = vld [vmem:[%s292 + $0x38] sm:$0xff]
        %v304 = vld [vmem:[%s292 + $0x40] sm:$0xff]
        %v305 = vld [vmem:[%s292 + $0x48] sm:$0xff]
        %v306 = vld [vmem:[%s292 + $0x50] sm:$0xff]
        %v307 = vld [vmem:[%s292 + $0x58] sm:$0xff]
        %v308 = vld [vmem:[%s292 + $0x60] sm:$0xff]
        %v309 = vld [vmem:[%s292 + $0x68] sm:$0xff]
        %v310 = vld [vmem:[%s292 + $0x70] sm:$0xff]
        %v311 = vld [vmem:[%s292 + $0x78] sm:$0xff]
        %v312 = vpack.c.bf16 %v297, %v296
        %v313 = vpack.c.bf16 %v299, %v298
        %v314 = vpack.c.bf16 %v301, %v300
        %v315 = vpack.c.bf16 %v303, %v302
        %v316 = vpack.c.bf16 %v305, %v304
        %v317 = vpack.c.bf16 %v307, %v306
        %v318 = vpack.c.bf16 %v309, %v308
        %v319 = vpack.c.bf16 %v311, %v310
        %v320 = vld [vmem:[%s1] sm:$0xff]
        %v321 = vld [vmem:[%s1 + $0x8] sm:$0xff]
        %v322 = vld [vmem:[%s1 + $0x10] sm:$0xff]
        %v323 = vld [vmem:[%s1 + $0x18] sm:$0xff]
        %v324 = vld [vmem:[%s6] sm:$0x3]
        %v326 = vlaneseq
        %v327 = vshrl.u32 %v326, 7
        %v328 = vsub.s32 0, %v327
        %v329 = vrot.slane %v324, %v328
        %v330 = vlaneseq
        %v331 = vshrl.u32 %v330, 7
        %v332 = vsub.s32 1, %v331
        %v333 = vrot.slane %v324, %v332
        %v340 = vunpack.c.l.b16 %v320
        %v341 = vunpack.c.h.b16 %v320
        %v342 = vunpack.c.l.b16 %v321
        %v343 = vunpack.c.h.b16 %v321
        %v344 = vunpack.c.l.b16 %v322
        %v345 = vunpack.c.h.b16 %v322
        %v346 = vunpack.c.l.b16 %v323
        %v347 = vunpack.c.h.b16 %v323
        %v348 = vpack.c.b16 %v342, %v340
        %v349 = vpack.c.b16 %v343, %v341
        %v350 = vpack.c.b16 %v346, %v344
        %v351 = vpack.c.b16 %v347, %v345
        %vm356 = vcmask 261120
        %v358 = vsel %vm356, %v312, 0
        %v361 = vsel %vm356, %v313, 0
        %v364 = vsel %vm356, %v314, 0
        %v367 = vsel %vm356, %v315, 0
        %v370 = vsel %vm356, %v316, 0
        %v373 = vsel %vm356, %v317, 0
        %v376 = vsel %vm356, %v318, 0
        %v379 = vsel %vm356, %v319, 0
        %381 = vmatprep.subr.bf16.mxu0 %v349
        %382 = vmatpush1.bf16.msra.mxu0 %v348
        %383 = vmatprep.subr.bf16.mxu0 %v351
        %384 = vmatpush1.bf16.msra.mxu0 %v350
        %385 = vmatprep.subr.bf16.mxu0 0
        %386 = vmatpush1.bf16.msra.mxu0 0
        %387 = vmatprep.subr.bf16.mxu0 0
        %388 = vmatpush1.bf16.msra.mxu0 0
        %389 = vmatprep.subr.bf16.mxu0 0
        %390 = vmatpush1.bf16.msra.mxu0 0
        %391 = vmatprep.subr.bf16.mxu0 0
        %392 = vmatpush1.bf16.msra.mxu0 0
        %393 = vmatprep.subr.bf16.mxu0 0
        %394 = vmatpush1.bf16.msra.mxu0 0
        %395 = vmatprep.subr.bf16.mxu0 0
        %396 = vmatpush1.bf16.msra.mxu0 0
        %397 = vmatprep.subr.bf16.mxu0 0
        %398 = vmatpush1.bf16.msra.mxu0 0
        %399 = vmatprep.subr.bf16.mxu0 0
        %400 = vmatpush1.bf16.msra.mxu0 0
        %401 = vmatprep.subr.bf16.mxu0 0
        %402 = vmatpush1.bf16.msra.mxu0 0
        %403 = vmatprep.subr.bf16.mxu0 0
        %404 = vmatpush1.bf16.msra.mxu0 0
        %405 = vmatprep.subr.bf16.mxu0 0
        %406 = vmatpush1.bf16.msra.mxu0 0
        %407 = vmatprep.subr.bf16.mxu0 0
        %408 = vmatpush1.bf16.msra.mxu0 0
        %409 = vmatprep.subr.bf16.mxu0 0
        %410 = vmatpush1.bf16.msra.mxu0 0
        %411 = vmatprep.subr.bf16.mxu0 0
        %412 = vmatpush1.bf16.msra.mxu0 0
        %413 = vmatprep.mubr.bf16.mxu0 0
        %414 = vmatmul.mubr.bf16.gmra.mrb[0].mxu0 %v358
        %v415 = vpop.f32.mrb[0].mxu0
        %v416 = vadd.f32 %v329, %v415
        %v417 = vpop.f32.mrb[0].mxu0
        %v418 = vadd.f32 %v333, %v417
        %v419 = vpop.f32.mrb[0].mxu0
        %v420 = vadd.f32 %v329, %v419
        %v421 = vpop.f32.mrb[0].mxu0
        %v422 = vadd.f32 %v333, %v421
        %423 = vmatprep.mubr.bf16.mxu0 0
        %424 = vmatmul.mubr.bf16.gmra.mrb[0].mxu0 %v361
        %v425 = vpop.f32.mrb[0].mxu0
        %v426 = vadd.f32 %v329, %v425
        %v427 = vpop.f32.mrb[0].mxu0
        %v428 = vadd.f32 %v333, %v427
        %v429 = vpop.f32.mrb[0].mxu0
        %v430 = vadd.f32 %v329, %v429
        %v431 = vpop.f32.mrb[0].mxu0
        %v432 = vadd.f32 %v333, %v431
        %433 = vmatprep.mubr.bf16.mxu0 0
        %434 = vmatmul.mubr.bf16.gmra.mrb[0].mxu0 %v364
        %v435 = vpop.f32.mrb[0].mxu0
        %v436 = vadd.f32 %v329, %v435
        %v437 = vpop.f32.mrb[0].mxu0
        %v438 = vadd.f32 %v333, %v437
        %v439 = vpop.f32.mrb[0].mxu0
        %v440 = vadd.f32 %v329, %v439
        %v441 = vpop.f32.mrb[0].mxu0
        %v442 = vadd.f32 %v333, %v441
        %443 = vmatprep.mubr.bf16.mxu0 0
        %444 = vmatmul.mubr.bf16.gmra.mrb[0].mxu0 %v367
        %v445 = vpop.f32.mrb[0].mxu0
        %v446 = vadd.f32 %v329, %v445
        %v447 = vpop.f32.mrb[0].mxu0
        %v448 = vadd.f32 %v333, %v447
        %v449 = vpop.f32.mrb[0].mxu0
        %v450 = vadd.f32 %v329, %v449
        %v451 = vpop.f32.mrb[0].mxu0
        %v452 = vadd.f32 %v333, %v451
        %453 = vmatprep.mubr.bf16.mxu0 0
        %454 = vmatmul.mubr.bf16.gmra.mrb[0].mxu0 %v370
        %v455 = vpop.f32.mrb[0].mxu0
        %v456 = vadd.f32 %v329, %v455
        %v457 = vpop.f32.mrb[0].mxu0
        %v458 = vadd.f32 %v333, %v457
        %v459 = vpop.f32.mrb[0].mxu0
        %v460 = vadd.f32 %v329, %v459
        %v461 = vpop.f32.mrb[0].mxu0
        %v462 = vadd.f32 %v333, %v461
        %463 = vmatprep.mubr.bf16.mxu0 0
        %464 = vmatmul.mubr.bf16.gmra.mrb[0].mxu0 %v373
        %v465 = vpop.f32.mrb[0].mxu0
        %v466 = vadd.f32 %v329, %v465
        %v467 = vpop.f32.mrb[0].mxu0
        %v468 = vadd.f32 %v333, %v467
        %v469 = vpop.f32.mrb[0].mxu0
        %v470 = vadd.f32 %v329, %v469
        %v471 = vpop.f32.mrb[0].mxu0
        %v472 = vadd.f32 %v333, %v471
        %473 = vmatprep.mubr.bf16.mxu0 0
        %474 = vmatmul.mubr.bf16.gmra.mrb[0].mxu0 %v376
        %v475 = vpop.f32.mrb[0].mxu0
        %v476 = vadd.f32 %v329, %v475
        %v477 = vpop.f32.mrb[0].mxu0
        %v478 = vadd.f32 %v333, %v477
        %v479 = vpop.f32.mrb[0].mxu0
        %v480 = vadd.f32 %v329, %v479
        %v481 = vpop.f32.mrb[0].mxu0
        %v482 = vadd.f32 %v333, %v481
        %483 = vmatprep.mubr.bf16.mxu0 0
        %484 = vmatmul.mubr.bf16.gmra.mrb[0].mxu0 %v379
        %v485 = vpop.f32.mrb[0].mxu0
        %v486 = vadd.f32 %v329, %v485
        %v487 = vpop.f32.mrb[0].mxu0
        %v488 = vadd.f32 %v333, %v487
        %v489 = vpop.f32.mrb[0].mxu0
        %v490 = vadd.f32 %v329, %v489
        %v491 = vpop.f32.mrb[0].mxu0
        %v492 = vadd.f32 %v333, %v491
        %493 = vdwg.mxu0
        %v494 = vmax.f32 %v416, 0.0
        %v495 = vmax.f32 %v418, 0.0
        %v496 = vmax.f32 %v420, 0.0
        %v497 = vmax.f32 %v422, 0.0
        %v498 = vmax.f32 %v426, 0.0
        %v499 = vmax.f32 %v428, 0.0
        %v500 = vmax.f32 %v430, 0.0
        %v501 = vmax.f32 %v432, 0.0
        %v502 = vmax.f32 %v436, 0.0
        %v503 = vmax.f32 %v438, 0.0
        %v504 = vmax.f32 %v440, 0.0
        %v505 = vmax.f32 %v442, 0.0
        %v506 = vmax.f32 %v446, 0.0
        %v507 = vmax.f32 %v448, 0.0
        %v508 = vmax.f32 %v450, 0.0
        %v509 = vmax.f32 %v452, 0.0
        %v510 = vmax.f32 %v456, 0.0
        %v511 = vmax.f32 %v458, 0.0
        %v512 = vmax.f32 %v460, 0.0
        %v513 = vmax.f32 %v462, 0.0
        %v514 = vmax.f32 %v466, 0.0
        %v515 = vmax.f32 %v468, 0.0
        %v516 = vmax.f32 %v470, 0.0
        %v517 = vmax.f32 %v472, 0.0
        %v518 = vmax.f32 %v476, 0.0
        %v519 = vmax.f32 %v478, 0.0
        %v520 = vmax.f32 %v480, 0.0
        %v521 = vmax.f32 %v482, 0.0
        %v522 = vmax.f32 %v486, 0.0
        %v523 = vmax.f32 %v488, 0.0
        %v524 = vmax.f32 %v490, 0.0
        %v525 = vmax.f32 %v492, 0.0
        %v526 = vpack.c.bf16 %v496, %v494
        %v527 = vpack.c.bf16 %v497, %v495
        %v528 = vpack.c.bf16 %v500, %v498
        %v529 = vpack.c.bf16 %v501, %v499
        %v530 = vpack.c.bf16 %v504, %v502
        %v531 = vpack.c.bf16 %v505, %v503
        %v532 = vpack.c.bf16 %v508, %v506
        %v533 = vpack.c.bf16 %v509, %v507
        %v534 = vpack.c.bf16 %v512, %v510
        %v535 = vpack.c.bf16 %v513, %v511
        %v536 = vpack.c.bf16 %v516, %v514
        %v537 = vpack.c.bf16 %v517, %v515
        %v538 = vpack.c.bf16 %v520, %v518
        %v539 = vpack.c.bf16 %v521, %v519
        %v540 = vpack.c.bf16 %v524, %v522
        %v541 = vpack.c.bf16 %v525, %v523
        %v542 = vld [vmem:[%s2] sm:$0xff]
        %v543 = vld [vmem:[%s2 + $0x8] sm:$0xff]
        %v544 = vld [vmem:[%s2 + $0x10] sm:$0xff]
        %v545 = vld [vmem:[%s2 + $0x18] sm:$0xff]
        %v546 = vld [vmem:[%s2 + $0x20] sm:$0xff]
        %v547 = vld [vmem:[%s2 + $0x28] sm:$0xff]
        %v548 = vld [vmem:[%s2 + $0x30] sm:$0xff]
        %v549 = vld [vmem:[%s2 + $0x38] sm:$0xff]
        %v550 = vld [vmem:[%s2 + $0x40] sm:$0xff]
        %v551 = vld [vmem:[%s2 + $0x48] sm:$0xff]
        %v552 = vld [vmem:[%s2 + $0x50] sm:$0xff]
        %v553 = vld [vmem:[%s2 + $0x58] sm:$0xff]
        %v554 = vld [vmem:[%s2 + $0x60] sm:$0xff]
        %v555 = vld [vmem:[%s2 + $0x68] sm:$0xff]
        %v556 = vld [vmem:[%s2 + $0x70] sm:$0xff]
        %v557 = vld [vmem:[%s2 + $0x78] sm:$0xff]
        %v558 = vld [vmem:[%s2 + $0x80] sm:$0xff]
        %v559 = vld [vmem:[%s2 + $0x88] sm:$0xff]
        %v560 = vld [vmem:[%s2 + $0x90] sm:$0xff]
        %v561 = vld [vmem:[%s2 + $0x98] sm:$0xff]
        %v562 = vld [vmem:[%s2 + $0xa0] sm:$0xff]
        %v563 = vld [vmem:[%s2 + $0xa8] sm:$0xff]
        %v564 = vld [vmem:[%s2 + $0xb0] sm:$0xff]
        %v565 = vld [vmem:[%s2 + $0xb8] sm:$0xff]
        %v566 = vld [vmem:[%s2 + $0xc0] sm:$0xff]
        %v567 = vld [vmem:[%s2 + $0xc8] sm:$0xff]
        %v568 = vld [vmem:[%s2 + $0xd0] sm:$0xff]
        %v569 = vld [vmem:[%s2 + $0xd8] sm:$0xff]
        %v570 = vld [vmem:[%s2 + $0xe0] sm:$0xff]
        %v571 = vld [vmem:[%s2 + $0xe8] sm:$0xff]
        %v572 = vld [vmem:[%s2 + $0xf0] sm:$0xff]
        %v573 = vld [vmem:[%s2 + $0xf8] sm:$0xff]
        %v574 = vld [vmem:[%s6 + $0x2] sm:$0x3]
        %v576 = vlaneseq
        %v577 = vshrl.u32 %v576, 7
        %v578 = vsub.s32 0, %v577
        %v579 = vrot.slane %v574, %v578
        %v580 = vlaneseq
        %v581 = vshrl.u32 %v580, 7
        %v582 = vsub.s32 1, %v581
        %v583 = vrot.slane %v574, %v582
        %v618 = vunpack.c.l.b16 %v542
        %v619 = vunpack.c.h.b16 %v542
        %v620 = vunpack.c.l.b16 %v543
        %v621 = vunpack.c.h.b16 %v543
        %v622 = vunpack.c.l.b16 %v544
        %v623 = vunpack.c.h.b16 %v544
        %v624 = vunpack.c.l.b16 %v545
        %v625 = vunpack.c.h.b16 %v545
        %v626 = vunpack.c.l.b16 %v546
        %v627 = vunpack.c.h.b16 %v546
        %v628 = vunpack.c.l.b16 %v547
        %v629 = vunpack.c.h.b16 %v547
        %v630 = vunpack.c.l.b16 %v548
        %v631 = vunpack.c.h.b16 %v548
        %v632 = vunpack.c.l.b16 %v549
        %v633 = vunpack.c.h.b16 %v549
        %v634 = vunpack.c.l.b16 %v550
        %v635 = vunpack.c.h.b16 %v550
        %v636 = vunpack.c.l.b16 %v551
        %v637 = vunpack.c.h.b16 %v551
        %v638 = vunpack.c.l.b16 %v552
        %v639 = vunpack.c.h.b16 %v552
        %v640 = vunpack.c.l.b16 %v553
        %v641 = vunpack.c.h.b16 %v553
        %v642 = vunpack.c.l.b16 %v554
        %v643 = vunpack.c.h.b16 %v554
        %v644 = vunpack.c.l.b16 %v555
        %v645 = vunpack.c.h.b16 %v555
        %v646 = vunpack.c.l.b16 %v556
        %v647 = vunpack.c.h.b16 %v556
        %v648 = vunpack.c.l.b16 %v557
        %v649 = vunpack.c.h.b16 %v557
        %v650 = vunpack.c.l.b16 %v558
        %v651 = vunpack.c.h.b16 %v558
        %v652 = vunpack.c.l.b16 %v559
        %v653 = vunpack.c.h.b16 %v559
        %v654 = vunpack.c.l.b16 %v560
        %v655 = vunpack.c.h.b16 %v560
        %v656 = vunpack.c.l.b16 %v561
        %v657 = vunpack.c.h.b16 %v561
        %v658 = vunpack.c.l.b16 %v562
        %v659 = vunpack.c.h.b16 %v562
        %v660 = vunpack.c.l.b16 %v563
        %v661 = vunpack.c.h.b16 %v563
        %v662 = vunpack.c.l.b16 %v564
        %v663 = vunpack.c.h.b16 %v564
        %v664 = vunpack.c.l.b16 %v565
        %v665 = vunpack.c.h.b16 %v565
        %v666 = vunpack.c.l.b16 %v566
        %v667 = vunpack.c.h.b16 %v566
        %v668 = vunpack.c.l.b16 %v567
        %v669 = vunpack.c.h.b16 %v567
        %v670 = vunpack.c.l.b16 %v568
        %v671 = vunpack.c.h.b16 %v568
        %v672 = vunpack.c.l.b16 %v569
        %v673 = vunpack.c.h.b16 %v569
        %v674 = vunpack.c.l.b16 %v570
        %v675 = vunpack.c.h.b16 %v570
        %v676 = vunpack.c.l.b16 %v571
        %v677 = vunpack.c.h.b16 %v571
        %v678 = vunpack.c.l.b16 %v572
        %v679 = vunpack.c.h.b16 %v572
        %v680 = vunpack.c.l.b16 %v573
        %v681 = vunpack.c.h.b16 %v573
        %v682 = vpack.c.b16 %v620, %v618
        %v683 = vpack.c.b16 %v621, %v619
        %v684 = vpack.c.b16 %v624, %v622
        %v685 = vpack.c.b16 %v625, %v623
        %v686 = vpack.c.b16 %v628, %v626
        %v687 = vpack.c.b16 %v629, %v627
        %v688 = vpack.c.b16 %v632, %v630
        %v689 = vpack.c.b16 %v633, %v631
        %v690 = vpack.c.b16 %v636, %v634
        %v691 = vpack.c.b16 %v637, %v635
        %v692 = vpack.c.b16 %v640, %v638
        %v693 = vpack.c.b16 %v641, %v639
        %v694 = vpack.c.b16 %v644, %v642
        %v695 = vpack.c.b16 %v645, %v643
        %v696 = vpack.c.b16 %v648, %v646
        %v697 = vpack.c.b16 %v649, %v647
        %v698 = vpack.c.b16 %v652, %v650
        %v699 = vpack.c.b16 %v653, %v651
        %v700 = vpack.c.b16 %v656, %v654
        %v701 = vpack.c.b16 %v657, %v655
        %v702 = vpack.c.b16 %v660, %v658
        %v703 = vpack.c.b16 %v661, %v659
        %v704 = vpack.c.b16 %v664, %v662
        %v705 = vpack.c.b16 %v665, %v663
        %v706 = vpack.c.b16 %v668, %v666
        %v707 = vpack.c.b16 %v669, %v667
        %v708 = vpack.c.b16 %v672, %v670
        %v709 = vpack.c.b16 %v673, %v671
        %v710 = vpack.c.b16 %v676, %v674
        %v711 = vpack.c.b16 %v677, %v675
        %v712 = vpack.c.b16 %v680, %v678
        %v713 = vpack.c.b16 %v681, %v679
        %746 = vmatprep.subr.bf16.mxu0 %v683
        %747 = vmatpush1.bf16.msra.mxu0 %v682
        %748 = vmatprep.subr.bf16.mxu0 %v685
        %749 = vmatpush1.bf16.msra.mxu0 %v684
        %750 = vmatprep.subr.bf16.mxu0 %v687
        %751 = vmatpush1.bf16.msra.mxu0 %v686
        %752 = vmatprep.subr.bf16.mxu0 %v689
        %753 = vmatpush1.bf16.msra.mxu0 %v688
        %754 = vmatprep.subr.bf16.mxu0 %v691
        %755 = vmatpush1.bf16.msra.mxu0 %v690
        %756 = vmatprep.subr.bf16.mxu0 %v693
        %757 = vmatpush1.bf16.msra.mxu0 %v692
        %758 = vmatprep.subr.bf16.mxu0 %v695
        %759 = vmatpush1.bf16.msra.mxu0 %v694
        %760 = vmatprep.subr.bf16.mxu0 %v697
        %761 = vmatpush1.bf16.msra.mxu0 %v696
        %762 = vmatprep.subr.bf16.mxu0 %v699
        %763 = vmatpush1.bf16.msra.mxu0 %v698
        %764 = vmatprep.subr.bf16.mxu0 %v701
        %765 = vmatpush1.bf16.msra.mxu0 %v700
        %766 = vmatprep.subr.bf16.mxu0 %v703
        %767 = vmatpush1.bf16.msra.mxu0 %v702
        %768 = vmatprep.subr.bf16.mxu0 %v705
        %769 = vmatpush1.bf16.msra.mxu0 %v704
        %770 = vmatprep.subr.bf16.mxu0 %v707
        %771 = vmatpush1.bf16.msra.mxu0 %v706
        %772 = vmatprep.subr.bf16.mxu0 %v709
        %773 = vmatpush1.bf16.msra.mxu0 %v708
        %774 = vmatprep.subr.bf16.mxu0 %v711
        %775 = vmatpush1.bf16.msra.mxu0 %v710
        %776 = vmatprep.subr.bf16.mxu0 %v713
        %777 = vmatpush1.bf16.msra.mxu0 %v712
        %778 = vmatprep.mubr.bf16.mxu0 %v527
        %779 = vmatmul.mubr.bf16.gmra.mrb[0].mxu0 %v526
        %v780 = vpop.f32.mrb[0].mxu0
        %v781 = vadd.f32 %v579, %v780
        %v782 = vpop.f32.mrb[0].mxu0
        %v783 = vadd.f32 %v583, %v782
        %v784 = vpop.f32.mrb[0].mxu0
        %v785 = vadd.f32 %v579, %v784
        %v786 = vpop.f32.mrb[0].mxu0
        %v787 = vadd.f32 %v583, %v786
        %788 = vmatprep.mubr.bf16.mxu0 %v529
        %789 = vmatmul.mubr.bf16.gmra.mrb[0].mxu0 %v528
        %v790 = vpop.f32.mrb[0].mxu0
        %v791 = vadd.f32 %v579, %v790
        %v792 = vpop.f32.mrb[0].mxu0
        %v793 = vadd.f32 %v583, %v792
        %v794 = vpop.f32.mrb[0].mxu0
        %v795 = vadd.f32 %v579, %v794
        %v796 = vpop.f32.mrb[0].mxu0
        %v797 = vadd.f32 %v583, %v796
        %798 = vmatprep.mubr.bf16.mxu0 %v531
        %799 = vmatmul.mubr.bf16.gmra.mrb[0].mxu0 %v530
        %v800 = vpop.f32.mrb[0].mxu0
        %v801 = vadd.f32 %v579, %v800
        %v802 = vpop.f32.mrb[0].mxu0
        %v803 = vadd.f32 %v583, %v802
        %v804 = vpop.f32.mrb[0].mxu0
        %v805 = vadd.f32 %v579, %v804
        %v806 = vpop.f32.mrb[0].mxu0
        %v807 = vadd.f32 %v583, %v806
        %808 = vmatprep.mubr.bf16.mxu0 %v533
        %809 = vmatmul.mubr.bf16.gmra.mrb[0].mxu0 %v532
        %v810 = vpop.f32.mrb[0].mxu0
        %v811 = vadd.f32 %v579, %v810
        %v812 = vpop.f32.mrb[0].mxu0
        %v813 = vadd.f32 %v583, %v812
        %v814 = vpop.f32.mrb[0].mxu0
        %v815 = vadd.f32 %v579, %v814
        %v816 = vpop.f32.mrb[0].mxu0
        %v817 = vadd.f32 %v583, %v816
        %818 = vmatprep.mubr.bf16.mxu0 %v535
        %819 = vmatmul.mubr.bf16.gmra.mrb[0].mxu0 %v534
        %v820 = vpop.f32.mrb[0].mxu0
        %v821 = vadd.f32 %v579, %v820
        %v822 = vpop.f32.mrb[0].mxu0
        %v823 = vadd.f32 %v583, %v822
        %v824 = vpop.f32.mrb[0].mxu0
        %v825 = vadd.f32 %v579, %v824
        %v826 = vpop.f32.mrb[0].mxu0
        %v827 = vadd.f32 %v583, %v826
        %828 = vmatprep.mubr.bf16.mxu0 %v537
        %829 = vmatmul.mubr.bf16.gmra.mrb[0].mxu0 %v536
        %v830 = vpop.f32.mrb[0].mxu0
        %v831 = vadd.f32 %v579, %v830
        %v832 = vpop.f32.mrb[0].mxu0
        %v833 = vadd.f32 %v583, %v832
        %v834 = vpop.f32.mrb[0].mxu0
        %v835 = vadd.f32 %v579, %v834
        %v836 = vpop.f32.mrb[0].mxu0
        %v837 = vadd.f32 %v583, %v836
        %838 = vmatprep.mubr.bf16.mxu0 %v539
        %839 = vmatmul.mubr.bf16.gmra.mrb[0].mxu0 %v538
        %v840 = vpop.f32.mrb[0].mxu0
        %v841 = vadd.f32 %v579, %v840
        %v842 = vpop.f32.mrb[0].mxu0
        %v843 = vadd.f32 %v583, %v842
        %v844 = vpop.f32.mrb[0].mxu0
        %v845 = vadd.f32 %v579, %v844
        %v846 = vpop.f32.mrb[0].mxu0
        %v847 = vadd.f32 %v583, %v846
        %848 = vmatprep.mubr.bf16.mxu0 %v541
        %849 = vmatmul.mubr.bf16.gmra.mrb[0].mxu0 %v540
        %v850 = vpop.f32.mrb[0].mxu0
        %v851 = vadd.f32 %v579, %v850
        %v852 = vpop.f32.mrb[0].mxu0
        %v853 = vadd.f32 %v583, %v852
        %v854 = vpop.f32.mrb[0].mxu0
        %v855 = vadd.f32 %v579, %v854
        %v856 = vpop.f32.mrb[0].mxu0
        %v857 = vadd.f32 %v583, %v856
        %858 = vdwg.mxu0
        %v859 = vmax.f32 %v781, 0.0
        %v860 = vmax.f32 %v783, 0.0
        %v861 = vmax.f32 %v785, 0.0
        %v862 = vmax.f32 %v787, 0.0
        %v863 = vmax.f32 %v791, 0.0
        %v864 = vmax.f32 %v793, 0.0
        %v865 = vmax.f32 %v795, 0.0
        %v866 = vmax.f32 %v797, 0.0
        %v867 = vmax.f32 %v801, 0.0
        %v868 = vmax.f32 %v803, 0.0
        %v869 = vmax.f32 %v805, 0.0
        %v870 = vmax.f32 %v807, 0.0
        %v871 = vmax.f32 %v811, 0.0
        %v872 = vmax.f32 %v813, 0.0
        %v873 = vmax.f32 %v815, 0.0
        %v874 = vmax.f32 %v817, 0.0
        %v875 = vmax.f32 %v821, 0.0
        %v876 = vmax.f32 %v823, 0.0
        %v877 = vmax.f32 %v825, 0.0
        %v878 = vmax.f32 %v827, 0.0
        %v879 = vmax.f32 %v831, 0.0
        %v880 = vmax.f32 %v833, 0.0
        %v881 = vmax.f32 %v835, 0.0
        %v882 = vmax.f32 %v837, 0.0
        %v883 = vmax.f32 %v841, 0.0
        %v884 = vmax.f32 %v843, 0.0
        %v885 = vmax.f32 %v845, 0.0
        %v886 = vmax.f32 %v847, 0.0
        %v887 = vmax.f32 %v851, 0.0
        %v888 = vmax.f32 %v853, 0.0
        %v889 = vmax.f32 %v855, 0.0
        %v890 = vmax.f32 %v857, 0.0
        %v891 = vpack.c.bf16 %v861, %v859
        %v892 = vpack.c.bf16 %v862, %v860
        %v893 = vpack.c.bf16 %v865, %v863
        %v894 = vpack.c.bf16 %v866, %v864
        %v895 = vpack.c.bf16 %v869, %v867
        %v896 = vpack.c.bf16 %v870, %v868
        %v897 = vpack.c.bf16 %v873, %v871
        %v898 = vpack.c.bf16 %v874, %v872
        %v899 = vpack.c.bf16 %v877, %v875
        %v900 = vpack.c.bf16 %v878, %v876
        %v901 = vpack.c.bf16 %v881, %v879
        %v902 = vpack.c.bf16 %v882, %v880
        %v903 = vpack.c.bf16 %v885, %v883
        %v904 = vpack.c.bf16 %v886, %v884
        %v905 = vpack.c.bf16 %v889, %v887
        %v906 = vpack.c.bf16 %v890, %v888
        %v907 = vld [vmem:[%s3] sm:$0xf]
        %v908 = vld [vmem:[%s3 + $0x4] sm:$0xf]
        %v909 = vld [vmem:[%s3 + $0x8] sm:$0xf]
        %v910 = vld [vmem:[%s3 + $0xc] sm:$0xf]
        %v911 = vld [vmem:[%s3 + $0x10] sm:$0xf]
        %v912 = vld [vmem:[%s3 + $0x14] sm:$0xf]
        %v913 = vld [vmem:[%s3 + $0x18] sm:$0xf]
        %v914 = vld [vmem:[%s3 + $0x1c] sm:$0xf]
        %v915 = vld [vmem:[%s3 + $0x20] sm:$0xf]
        %v916 = vld [vmem:[%s3 + $0x24] sm:$0xf]
        %v917 = vld [vmem:[%s3 + $0x28] sm:$0xf]
        %v918 = vld [vmem:[%s3 + $0x2c] sm:$0xf]
        %v919 = vld [vmem:[%s3 + $0x30] sm:$0xf]
        %v920 = vld [vmem:[%s3 + $0x34] sm:$0xf]
        %v921 = vld [vmem:[%s3 + $0x38] sm:$0xf]
        %v922 = vld [vmem:[%s3 + $0x3c] sm:$0xf]
        %v923 = vld [vmem:[%s3 + $0x40] sm:$0xf]
        %v924 = vld [vmem:[%s3 + $0x44] sm:$0xf]
        %v925 = vld [vmem:[%s3 + $0x48] sm:$0xf]
        %v926 = vld [vmem:[%s3 + $0x4c] sm:$0xf]
        %v927 = vld [vmem:[%s3 + $0x50] sm:$0xf]
        %v928 = vld [vmem:[%s3 + $0x54] sm:$0xf]
        %v929 = vld [vmem:[%s3 + $0x58] sm:$0xf]
        %v930 = vld [vmem:[%s3 + $0x5c] sm:$0xf]
        %v931 = vld [vmem:[%s3 + $0x60] sm:$0xf]
        %v932 = vld [vmem:[%s3 + $0x64] sm:$0xf]
        %v933 = vld [vmem:[%s3 + $0x68] sm:$0xf]
        %v934 = vld [vmem:[%s3 + $0x6c] sm:$0xf]
        %v935 = vld [vmem:[%s3 + $0x70] sm:$0xf]
        %v936 = vld [vmem:[%s3 + $0x74] sm:$0xf]
        %v937 = vld [vmem:[%s3 + $0x78] sm:$0xf]
        %v938 = vld [vmem:[%s3 + $0x7c] sm:$0xf]
        %v939 = vld [vmem:[%s6 + $0x4] sm:$0x1]
        %v941 = vlaneseq
        %v942 = vshrl.u32 %v941, 7
        %v943 = vsub.s32 0, %v942
        %v944 = vrot.slane %v939, %v943
        %v978 = vunpack.c.l.b16 %v907
        %v979 = vunpack.c.l.b16 %v908
        %v980 = vunpack.c.l.b16 %v909
        %v981 = vunpack.c.l.b16 %v910
        %v982 = vunpack.c.l.b16 %v911
        %v983 = vunpack.c.l.b16 %v912
        %v984 = vunpack.c.l.b16 %v913
        %v985 = vunpack.c.l.b16 %v914
        %v986 = vunpack.c.l.b16 %v915
        %v987 = vunpack.c.l.b16 %v916
        %v988 = vunpack.c.l.b16 %v917
        %v989 = vunpack.c.l.b16 %v918
        %v990 = vunpack.c.l.b16 %v919
        %v991 = vunpack.c.l.b16 %v920
        %v992 = vunpack.c.l.b16 %v921
        %v993 = vunpack.c.l.b16 %v922
        %v994 = vunpack.c.l.b16 %v923
        %v995 = vunpack.c.l.b16 %v924
        %v996 = vunpack.c.l.b16 %v925
        %v997 = vunpack.c.l.b16 %v926
        %v998 = vunpack.c.l.b16 %v927
        %v999 = vunpack.c.l.b16 %v928
        %v1000 = vunpack.c.l.b16 %v929
        %v1001 = vunpack.c.l.b16 %v930
        %v1002 = vunpack.c.l.b16 %v931
        %v1003 = vunpack.c.l.b16 %v932
        %v1004 = vunpack.c.l.b16 %v933
        %v1005 = vunpack.c.l.b16 %v934
        %v1006 = vunpack.c.l.b16 %v935
        %v1007 = vunpack.c.l.b16 %v936
        %v1008 = vunpack.c.l.b16 %v937
        %v1009 = vunpack.c.l.b16 %v938
        %v1010 = vpack.c.b16 %v979, %v978
        %v1011 = vpack.c.b16 %v981, %v980
        %v1012 = vpack.c.b16 %v983, %v982
        %v1013 = vpack.c.b16 %v985, %v984
        %v1014 = vpack.c.b16 %v987, %v986
        %v1015 = vpack.c.b16 %v989, %v988
        %v1016 = vpack.c.b16 %v991, %v990
        %v1017 = vpack.c.b16 %v993, %v992
        %v1018 = vpack.c.b16 %v995, %v994
        %v1019 = vpack.c.b16 %v997, %v996
        %v1020 = vpack.c.b16 %v999, %v998
        %v1021 = vpack.c.b16 %v1001, %v1000
        %v1022 = vpack.c.b16 %v1003, %v1002
        %v1023 = vpack.c.b16 %v1005, %v1004
        %v1024 = vpack.c.b16 %v1007, %v1006
        %v1025 = vpack.c.b16 %v1009, %v1008
        %1042 = vmatprep.subr.bf16.mxu0 0
        %1043 = vmatpush1.bf16.msra.mxu0 %v1010
        %1044 = vmatprep.subr.bf16.mxu0 0
        %1045 = vmatpush1.bf16.msra.mxu0 %v1011
        %1046 = vmatprep.subr.bf16.mxu0 0
        %1047 = vmatpush1.bf16.msra.mxu0 %v1012
        %1048 = vmatprep.subr.bf16.mxu0 0
        %1049 = vmatpush1.bf16.msra.mxu0 %v1013
        %1050 = vmatprep.subr.bf16.mxu0 0
        %1051 = vmatpush1.bf16.msra.mxu0 %v1014
        %1052 = vmatprep.subr.bf16.mxu0 0
        %1053 = vmatpush1.bf16.msra.mxu0 %v1015
        %1054 = vmatprep.subr.bf16.mxu0 0
        %1055 = vmatpush1.bf16.msra.mxu0 %v1016
        %1056 = vmatprep.subr.bf16.mxu0 0
        %1057 = vmatpush1.bf16.msra.mxu0 %v1017
        %1058 = vmatprep.subr.bf16.mxu0 0
        %1059 = vmatpush1.bf16.msra.mxu0 %v1018
        %1060 = vmatprep.subr.bf16.mxu0 0
        %1061 = vmatpush1.bf16.msra.mxu0 %v1019
        %1062 = vmatprep.subr.bf16.mxu0 0
        %1063 = vmatpush1.bf16.msra.mxu0 %v1020
        %1064 = vmatprep.subr.bf16.mxu0 0
        %1065 = vmatpush1.bf16.msra.mxu0 %v1021
        %1066 = vmatprep.subr.bf16.mxu0 0
        %1067 = vmatpush1.bf16.msra.mxu0 %v1022
        %1068 = vmatprep.subr.bf16.mxu0 0
        %1069 = vmatpush1.bf16.msra.mxu0 %v1023
        %1070 = vmatprep.subr.bf16.mxu0 0
        %1071 = vmatpush1.bf16.msra.mxu0 %v1024
        %1072 = vmatprep.subr.bf16.mxu0 0
        %1073 = vmatpush1.bf16.msra.mxu0 %v1025
        %1074 = vmatprep.mubr.bf16.mxu0 %v892
        %1075 = vmatmul.mubr.bf16.gmra.mrb[0].mxu0 %v891
        %v1076 = vpop.f32.mrb[0].mxu0
        %v1077 = vadd.f32 %v944, %v1076
        %v1078 = vpop.f32.mrb[0].mxu0
        %v1079 = vpop.f32.mrb[0].mxu0
        %v1080 = vadd.f32 %v944, %v1079
        %v1081 = vpop.f32.mrb[0].mxu0
        %1082 = vmatprep.mubr.bf16.mxu0 %v894
        %1083 = vmatmul.mubr.bf16.gmra.mrb[0].mxu0 %v893
        %v1084 = vpop.f32.mrb[0].mxu0
        %v1085 = vadd.f32 %v944, %v1084
        %v1086 = vpop.f32.mrb[0].mxu0
        %v1087 = vpop.f32.mrb[0].mxu0
        %v1088 = vadd.f32 %v944, %v1087
        %v1089 = vpop.f32.mrb[0].mxu0
        %1090 = vmatprep.mubr.bf16.mxu0 %v896
        %1091 = vmatmul.mubr.bf16.gmra.mrb[0].mxu0 %v895
        %v1092 = vpop.f32.mrb[0].mxu0
        %v1093 = vadd.f32 %v944, %v1092
        %v1094 = vpop.f32.mrb[0].mxu0
        %v1095 = vpop.f32.mrb[0].mxu0
        %v1096 = vadd.f32 %v944, %v1095
        %v1097 = vpop.f32.mrb[0].mxu0
        %1098 = vmatprep.mubr.bf16.mxu0 %v898
        %1099 = vmatmul.mubr.bf16.gmra.mrb[0].mxu0 %v897
        %v1100 = vpop.f32.mrb[0].mxu0
        %v1101 = vadd.f32 %v944, %v1100
        %v1102 = vpop.f32.mrb[0].mxu0
        %v1103 = vpop.f32.mrb[0].mxu0
        %v1104 = vadd.f32 %v944, %v1103
        %v1105 = vpop.f32.mrb[0].mxu0
        %1106 = vmatprep.mubr.bf16.mxu0 %v900
        %1107 = vmatmul.mubr.bf16.gmra.mrb[0].mxu0 %v899
        %v1108 = vpop.f32.mrb[0].mxu0
        %v1109 = vadd.f32 %v944, %v1108
        %v1110 = vpop.f32.mrb[0].mxu0
        %v1111 = vpop.f32.mrb[0].mxu0
        %v1112 = vadd.f32 %v944, %v1111
        %v1113 = vpop.f32.mrb[0].mxu0
        %1114 = vmatprep.mubr.bf16.mxu0 %v902
        %1115 = vmatmul.mubr.bf16.gmra.mrb[0].mxu0 %v901
        %v1116 = vpop.f32.mrb[0].mxu0
        %v1117 = vadd.f32 %v944, %v1116
        %v1118 = vpop.f32.mrb[0].mxu0
        %v1119 = vpop.f32.mrb[0].mxu0
        %v1120 = vadd.f32 %v944, %v1119
        %v1121 = vpop.f32.mrb[0].mxu0
        %1122 = vmatprep.mubr.bf16.mxu0 %v904
        %1123 = vmatmul.mubr.bf16.gmra.mrb[0].mxu0 %v903
        %v1124 = vpop.f32.mrb[0].mxu0
        %v1125 = vadd.f32 %v944, %v1124
        %v1126 = vpop.f32.mrb[0].mxu0
        %v1127 = vpop.f32.mrb[0].mxu0
        %v1128 = vadd.f32 %v944, %v1127
        %v1129 = vpop.f32.mrb[0].mxu0
        %1130 = vmatprep.mubr.bf16.mxu0 %v906
        %1131 = vmatmul.mubr.bf16.gmra.mrb[0].mxu0 %v905
        %v1132 = vpop.f32.mrb[0].mxu0
        %v1133 = vadd.f32 %v944, %v1132
        %v1134 = vpop.f32.mrb[0].mxu0
        %v1135 = vpop.f32.mrb[0].mxu0
        %v1136 = vadd.f32 %v944, %v1135
        %v1137 = vpop.f32.mrb[0].mxu0
        %1138 = vdwg.mxu0
        %v1139 = vmax.f32 %v1077, 0.0
        %v1140 = vmax.f32 %v1080, 0.0
        %v1141 = vmax.f32 %v1085, 0.0
        %v1142 = vmax.f32 %v1088, 0.0
        %v1143 = vmax.f32 %v1093, 0.0
        %v1144 = vmax.f32 %v1096, 0.0
        %v1145 = vmax.f32 %v1101, 0.0
        %v1146 = vmax.f32 %v1104, 0.0
        %v1147 = vmax.f32 %v1109, 0.0
        %v1148 = vmax.f32 %v1112, 0.0
        %v1149 = vmax.f32 %v1117, 0.0
        %v1150 = vmax.f32 %v1120, 0.0
        %v1151 = vmax.f32 %v1125, 0.0
        %v1152 = vmax.f32 %v1128, 0.0
        %v1153 = vmax.f32 %v1133, 0.0
        %v1154 = vmax.f32 %v1136, 0.0
        %v1155 = vpack.c.bf16 %v1140, %v1139
        %v1156 = vpack.c.bf16 %v1142, %v1141
        %v1157 = vpack.c.bf16 %v1144, %v1143
        %v1158 = vpack.c.bf16 %v1146, %v1145
        %v1159 = vpack.c.bf16 %v1148, %v1147
        %v1160 = vpack.c.bf16 %v1150, %v1149
        %v1161 = vpack.c.bf16 %v1152, %v1151
        %v1162 = vpack.c.bf16 %v1154, %v1153
        %v1163 = vld [vmem:[%s4] sm:$0xf]
        %v1164 = vld [vmem:[%s4 + $0x4] sm:$0xf]
        %v1165 = vld [vmem:[%s4 + $0x8] sm:$0xf]
        %v1166 = vld [vmem:[%s4 + $0xc] sm:$0xf]
        %v1167 = vld [vmem:[%s4 + $0x10] sm:$0xf]
        %v1168 = vld [vmem:[%s4 + $0x14] sm:$0xf]
        %v1169 = vld [vmem:[%s4 + $0x18] sm:$0xf]
        %v1170 = vld [vmem:[%s4 + $0x1c] sm:$0xf]
        %v1171 = vld [vmem:[%s4 + $0x20] sm:$0xf]
        %v1172 = vld [vmem:[%s4 + $0x24] sm:$0xf]
        %v1173 = vld [vmem:[%s4 + $0x28] sm:$0xf]
        %v1174 = vld [vmem:[%s4 + $0x2c] sm:$0xf]
        %v1175 = vld [vmem:[%s4 + $0x30] sm:$0xf]
        %v1176 = vld [vmem:[%s4 + $0x34] sm:$0xf]
        %v1177 = vld [vmem:[%s4 + $0x38] sm:$0xf]
        %v1178 = vld [vmem:[%s4 + $0x3c] sm:$0xf]
        %v1179 = vld [vmem:[%s6 + $0x5] sm:$0x1]
        %v1181 = vlaneseq
        %v1182 = vshrl.u32 %v1181, 7
        %v1183 = vsub.s32 0, %v1182
        %v1184 = vrot.slane %v1179, %v1183
        %v1202 = vunpack.c.l.b16 %v1163
        %v1203 = vunpack.c.l.b16 %v1164
        %v1204 = vunpack.c.l.b16 %v1165
        %v1205 = vunpack.c.l.b16 %v1166
        %v1206 = vunpack.c.l.b16 %v1167
        %v1207 = vunpack.c.l.b16 %v1168
        %v1208 = vunpack.c.l.b16 %v1169
        %v1209 = vunpack.c.l.b16 %v1170
        %v1210 = vunpack.c.l.b16 %v1171
        %v1211 = vunpack.c.l.b16 %v1172
        %v1212 = vunpack.c.l.b16 %v1173
        %v1213 = vunpack.c.l.b16 %v1174
        %v1214 = vunpack.c.l.b16 %v1175
        %v1215 = vunpack.c.l.b16 %v1176
        %v1216 = vunpack.c.l.b16 %v1177
        %v1217 = vunpack.c.l.b16 %v1178
        %v1218 = vpack.c.b16 %v1203, %v1202
        %v1219 = vpack.c.b16 %v1205, %v1204
        %v1220 = vpack.c.b16 %v1207, %v1206
        %v1221 = vpack.c.b16 %v1209, %v1208
        %v1222 = vpack.c.b16 %v1211, %v1210
        %v1223 = vpack.c.b16 %v1213, %v1212
        %v1224 = vpack.c.b16 %v1215, %v1214
        %v1225 = vpack.c.b16 %v1217, %v1216
        %1234 = vmatprep.subr.bf16.mxu0 0
        %1235 = vmatpush1.bf16.msra.mxu0 %v1218
        %1236 = vmatprep.subr.bf16.mxu0 0
        %1237 = vmatpush1.bf16.msra.mxu0 %v1219
        %1238 = vmatprep.subr.bf16.mxu0 0
        %1239 = vmatpush1.bf16.msra.mxu0 %v1220
        %1240 = vmatprep.subr.bf16.mxu0 0
        %1241 = vmatpush1.bf16.msra.mxu0 %v1221
        %1242 = vmatprep.subr.bf16.mxu0 0
        %1243 = vmatpush1.bf16.msra.mxu0 %v1222
        %1244 = vmatprep.subr.bf16.mxu0 0
        %1245 = vmatpush1.bf16.msra.mxu0 %v1223
        %1246 = vmatprep.subr.bf16.mxu0 0
        %1247 = vmatpush1.bf16.msra.mxu0 %v1224
        %1248 = vmatprep.subr.bf16.mxu0 0
        %1249 = vmatpush1.bf16.msra.mxu0 %v1225
        %1250 = vmatprep.subr.bf16.mxu0 0
        %1251 = vmatpush1.bf16.msra.mxu0 0
        %1252 = vmatprep.subr.bf16.mxu0 0
        %1253 = vmatpush1.bf16.msra.mxu0 0
        %1254 = vmatprep.subr.bf16.mxu0 0
        %1255 = vmatpush1.bf16.msra.mxu0 0
        %1256 = vmatprep.subr.bf16.mxu0 0
        %1257 = vmatpush1.bf16.msra.mxu0 0
        %1258 = vmatprep.subr.bf16.mxu0 0
        %1259 = vmatpush1.bf16.msra.mxu0 0
        %1260 = vmatprep.subr.bf16.mxu0 0
        %1261 = vmatpush1.bf16.msra.mxu0 0
        %1262 = vmatprep.subr.bf16.mxu0 0
        %1263 = vmatpush1.bf16.msra.mxu0 0
        %1264 = vmatprep.subr.bf16.mxu0 0
        %1265 = vmatpush1.bf16.msra.mxu0 0
        %1266 = vmatprep.mubr.bf16.mxu0 0
        %1267 = vmatmul.mubr.bf16.gmra.mrb[0].mxu0 %v1155
        %v1268 = vpop.f32.mrb[0].mxu0
        %v1269 = vadd.f32 %v1184, %v1268
        %v1270 = vpop.f32.mrb[0].mxu0
        %v1271 = vpop.f32.mrb[0].mxu0
        %v1272 = vadd.f32 %v1184, %v1271
        %v1273 = vpop.f32.mrb[0].mxu0
        %1274 = vmatprep.mubr.bf16.mxu0 0
        %1275 = vmatmul.mubr.bf16.gmra.mrb[0].mxu0 %v1156
        %v1276 = vpop.f32.mrb[0].mxu0
        %v1277 = vadd.f32 %v1184, %v1276
        %v1278 = vpop.f32.mrb[0].mxu0
        %v1279 = vpop.f32.mrb[0].mxu0
        %v1280 = vadd.f32 %v1184, %v1279
        %v1281 = vpop.f32.mrb[0].mxu0
        %1282 = vmatprep.mubr.bf16.mxu0 0
        %1283 = vmatmul.mubr.bf16.gmra.mrb[0].mxu0 %v1157
        %v1284 = vpop.f32.mrb[0].mxu0
        %v1285 = vadd.f32 %v1184, %v1284
        %v1286 = vpop.f32.mrb[0].mxu0
        %v1287 = vpop.f32.mrb[0].mxu0
        %v1288 = vadd.f32 %v1184, %v1287
        %v1289 = vpop.f32.mrb[0].mxu0
        %1290 = vmatprep.mubr.bf16.mxu0 0
        %1291 = vmatmul.mubr.bf16.gmra.mrb[0].mxu0 %v1158
        %v1292 = vpop.f32.mrb[0].mxu0
        %v1293 = vadd.f32 %v1184, %v1292
        %v1294 = vpop.f32.mrb[0].mxu0
        %v1295 = vpop.f32.mrb[0].mxu0
        %v1296 = vadd.f32 %v1184, %v1295
        %v1297 = vpop.f32.mrb[0].mxu0
        %1298 = vmatprep.mubr.bf16.mxu0 0
        %1299 = vmatmul.mubr.bf16.gmra.mrb[0].mxu0 %v1159
        %v1300 = vpop.f32.mrb[0].mxu0
        %v1301 = vadd.f32 %v1184, %v1300
        %v1302 = vpop.f32.mrb[0].mxu0
        %v1303 = vpop.f32.mrb[0].mxu0
        %v1304 = vadd.f32 %v1184, %v1303
        %v1305 = vpop.f32.mrb[0].mxu0
        %1306 = vmatprep.mubr.bf16.mxu0 0
        %1307 = vmatmul.mubr.bf16.gmra.mrb[0].mxu0 %v1160
        %v1308 = vpop.f32.mrb[0].mxu0
        %v1309 = vadd.f32 %v1184, %v1308
        %v1310 = vpop.f32.mrb[0].mxu0
        %v1311 = vpop.f32.mrb[0].mxu0
        %v1312 = vadd.f32 %v1184, %v1311
        %v1313 = vpop.f32.mrb[0].mxu0
        %1314 = vmatprep.mubr.bf16.mxu0 0
        %1315 = vmatmul.mubr.bf16.gmra.mrb[0].mxu0 %v1161
        %v1316 = vpop.f32.mrb[0].mxu0
        %v1317 = vadd.f32 %v1184, %v1316
        %v1318 = vpop.f32.mrb[0].mxu0
        %v1319 = vpop.f32.mrb[0].mxu0
        %v1320 = vadd.f32 %v1184, %v1319
        %v1321 = vpop.f32.mrb[0].mxu0
        %1322 = vmatprep.mubr.bf16.mxu0 0
        %1323 = vmatmul.mubr.bf16.gmra.mrb[0].mxu0 %v1162
        %v1324 = vpop.f32.mrb[0].mxu0
        %v1325 = vadd.f32 %v1184, %v1324
        %v1326 = vpop.f32.mrb[0].mxu0
        %v1327 = vpop.f32.mrb[0].mxu0
        %v1328 = vadd.f32 %v1184, %v1327
        %v1329 = vpop.f32.mrb[0].mxu0
        %1330 = vdwg.mxu0
        %v1331 = vmax.f32 %v1269, 0.0
        %v1332 = vmax.f32 %v1272, 0.0
        %v1333 = vmax.f32 %v1277, 0.0
        %v1334 = vmax.f32 %v1280, 0.0
        %v1335 = vmax.f32 %v1285, 0.0
        %v1336 = vmax.f32 %v1288, 0.0
        %v1337 = vmax.f32 %v1293, 0.0
        %v1338 = vmax.f32 %v1296, 0.0
        %v1339 = vmax.f32 %v1301, 0.0
        %v1340 = vmax.f32 %v1304, 0.0
        %v1341 = vmax.f32 %v1309, 0.0
        %v1342 = vmax.f32 %v1312, 0.0
        %v1343 = vmax.f32 %v1317, 0.0
        %v1344 = vmax.f32 %v1320, 0.0
        %v1345 = vmax.f32 %v1325, 0.0
        %v1346 = vmax.f32 %v1328, 0.0
        %v1347 = vpack.c.bf16 %v1332, %v1331
        %v1348 = vpack.c.bf16 %v1334, %v1333
        %v1349 = vpack.c.bf16 %v1336, %v1335
        %v1350 = vpack.c.bf16 %v1338, %v1337
        %v1351 = vpack.c.bf16 %v1340, %v1339
        %v1352 = vpack.c.bf16 %v1342, %v1341
        %v1353 = vpack.c.bf16 %v1344, %v1343
        %v1354 = vpack.c.bf16 %v1346, %v1345
        %v1355 = vld [vmem:[#allocation2] sm:$0xf]
        %v1356 = vld [vmem:[#allocation2 + $0x4] sm:$0xf]
        %v1357 = vld [vmem:[#allocation2 + $0x8] sm:$0xf]
        %v1358 = vld [vmem:[#allocation2 + $0xc] sm:$0xf]
        %v1359 = vld [vmem:[#allocation2 + $0x10] sm:$0xf]
        %v1360 = vld [vmem:[#allocation2 + $0x14] sm:$0xf]
        %v1361 = vld [vmem:[#allocation2 + $0x18] sm:$0xf]
        %v1362 = vld [vmem:[#allocation2 + $0x1c] sm:$0xf]
        %v1363 = vld [vmem:[%s6 + $0x6] sm:$0x1]
        %v1365 = vlaneseq
        %v1366 = vshrl.u32 %v1365, 7
        %v1367 = vsub.s32 0, %v1366
        %v1368 = vrot.slane %v1363, %v1367
        %v1378 = vunpack.c.l.b16 %v1355
        %v1379 = vunpack.c.l.b16 %v1356
        %v1380 = vunpack.c.l.b16 %v1357
        %v1381 = vunpack.c.l.b16 %v1358
        %v1382 = vunpack.c.l.b16 %v1359
        %v1383 = vunpack.c.l.b16 %v1360
        %v1384 = vunpack.c.l.b16 %v1361
        %v1385 = vunpack.c.l.b16 %v1362
        %v1386 = vpack.c.b16 %v1379, %v1378
        %v1387 = vpack.c.b16 %v1381, %v1380
        %v1388 = vpack.c.b16 %v1383, %v1382
        %v1389 = vpack.c.b16 %v1385, %v1384
        %vm1394 = vcmask 523264
        %v1396 = vsel %vm1394, %v1347, 0
        %v1399 = vsel %vm1394, %v1348, 0
        %v1402 = vsel %vm1394, %v1349, 0
        %v1405 = vsel %vm1394, %v1350, 0
        %v1408 = vsel %vm1394, %v1351, 0
        %v1411 = vsel %vm1394, %v1352, 0
        %v1414 = vsel %vm1394, %v1353, 0
        %v1417 = vsel %vm1394, %v1354, 0
        %1419 = vmatprep.subr.bf16.mxu0 0
        %1420 = vmatpush1.bf16.msra.mxu0 %v1386
        %1421 = vmatprep.subr.bf16.mxu0 0
        %1422 = vmatpush1.bf16.msra.mxu0 %v1387
        %1423 = vmatprep.subr.bf16.mxu0 0
        %1424 = vmatpush1.bf16.msra.mxu0 %v1388
        %1425 = vmatprep.subr.bf16.mxu0 0
        %1426 = vmatpush1.bf16.msra.mxu0 %v1389
        %1427 = vmatprep.subr.bf16.mxu0 0
        %1428 = vmatpush1.bf16.msra.mxu0 0
        %1429 = vmatprep.subr.bf16.mxu0 0
        %1430 = vmatpush1.bf16.msra.mxu0 0
        %1431 = vmatprep.subr.bf16.mxu0 0
        %1432 = vmatpush1.bf16.msra.mxu0 0
        %1433 = vmatprep.subr.bf16.mxu0 0
        %1434 = vmatpush1.bf16.msra.mxu0 0
        %1435 = vmatprep.subr.bf16.mxu0 0
        %1436 = vmatpush1.bf16.msra.mxu0 0
        %1437 = vmatprep.subr.bf16.mxu0 0
        %1438 = vmatpush1.bf16.msra.mxu0 0
        %1439 = vmatprep.subr.bf16.mxu0 0
        %1440 = vmatpush1.bf16.msra.mxu0 0
        %1441 = vmatprep.subr.bf16.mxu0 0
        %1442 = vmatpush1.bf16.msra.mxu0 0
        %1443 = vmatprep.subr.bf16.mxu0 0
        %1444 = vmatpush1.bf16.msra.mxu0 0
        %1445 = vmatprep.subr.bf16.mxu0 0
        %1446 = vmatpush1.bf16.msra.mxu0 0
        %1447 = vmatprep.subr.bf16.mxu0 0
        %1448 = vmatpush1.bf16.msra.mxu0 0
        %1449 = vmatprep.subr.bf16.mxu0 0
        %1450 = vmatpush1.bf16.msra.mxu0 0
        %1451 = vmatprep.mubr.bf16.mxu0 0
        %1452 = vmatmul.mubr.bf16.gmra.mrb[0].mxu0 %v1396
        %v1453 = vpop.f32.mrb[0].mxu0
        %v1454 = vadd.f32 %v1368, %v1453
        %v1455 = vpop.f32.mrb[0].mxu0
        %v1456 = vpop.f32.mrb[0].mxu0
        %v1457 = vadd.f32 %v1368, %v1456
        %v1458 = vpop.f32.mrb[0].mxu0
        %1459 = vmatprep.mubr.bf16.mxu0 0
        %1460 = vmatmul.mubr.bf16.gmra.mrb[0].mxu0 %v1399
        %v1461 = vpop.f32.mrb[0].mxu0
        %v1462 = vadd.f32 %v1368, %v1461
        %v1463 = vpop.f32.mrb[0].mxu0
        %v1464 = vpop.f32.mrb[0].mxu0
        %v1465 = vadd.f32 %v1368, %v1464
        %v1466 = vpop.f32.mrb[0].mxu0
        %1467 = vmatprep.mubr.bf16.mxu0 0
        %1468 = vmatmul.mubr.bf16.gmra.mrb[0].mxu0 %v1402
        %v1469 = vpop.f32.mrb[0].mxu0
        %v1470 = vadd.f32 %v1368, %v1469
        %v1471 = vpop.f32.mrb[0].mxu0
        %v1472 = vpop.f32.mrb[0].mxu0
        %v1473 = vadd.f32 %v1368, %v1472
        %v1474 = vpop.f32.mrb[0].mxu0
        %1475 = vmatprep.mubr.bf16.mxu0 0
        %1476 = vmatmul.mubr.bf16.gmra.mrb[0].mxu0 %v1405
        %v1477 = vpop.f32.mrb[0].mxu0
        %v1478 = vadd.f32 %v1368, %v1477
        %v1479 = vpop.f32.mrb[0].mxu0
        %v1480 = vpop.f32.mrb[0].mxu0
        %v1481 = vadd.f32 %v1368, %v1480
        %v1482 = vpop.f32.mrb[0].mxu0
        %1483 = vmatprep.mubr.bf16.mxu0 0
        %1484 = vmatmul.mubr.bf16.gmra.mrb[0].mxu0 %v1408
        %v1485 = vpop.f32.mrb[0].mxu0
        %v1486 = vadd.f32 %v1368, %v1485
        %v1487 = vpop.f32.mrb[0].mxu0
        %v1488 = vpop.f32.mrb[0].mxu0
        %v1489 = vadd.f32 %v1368, %v1488
        %v1490 = vpop.f32.mrb[0].mxu0
        %1491 = vmatprep.mubr.bf16.mxu0 0
        %1492 = vmatmul.mubr.bf16.gmra.mrb[0].mxu0 %v1411
        %v1493 = vpop.f32.mrb[0].mxu0
        %v1494 = vadd.f32 %v1368, %v1493
        %v1495 = vpop.f32.mrb[0].mxu0
        %v1496 = vpop.f32.mrb[0].mxu0
        %v1497 = vadd.f32 %v1368, %v1496
        %v1498 = vpop.f32.mrb[0].mxu0
        %1499 = vmatprep.mubr.bf16.mxu0 0
        %1500 = vmatmul.mubr.bf16.gmra.mrb[0].mxu0 %v1414
        %v1501 = vpop.f32.mrb[0].mxu0
        %v1502 = vadd.f32 %v1368, %v1501
        %v1503 = vpop.f32.mrb[0].mxu0
        %v1504 = vpop.f32.mrb[0].mxu0
        %v1505 = vadd.f32 %v1368, %v1504
        %v1506 = vpop.f32.mrb[0].mxu0
        %1507 = vmatprep.mubr.bf16.mxu0 0
        %1508 = vmatmul.mubr.bf16.gmra.mrb[0].mxu0 %v1417
        %v1509 = vpop.f32.mrb[0].mxu0
        %v1510 = vadd.f32 %v1368, %v1509
        %v1511 = vpop.f32.mrb[0].mxu0
        %v1512 = vpop.f32.mrb[0].mxu0
        %v1513 = vadd.f32 %v1368, %v1512
        %v1514 = vpop.f32.mrb[0].mxu0
        %1515 = vdwg.mxu0
        %1516 = vst [vmem:[%s287] sm:$0xff] %v1454
        %1517 = vst [vmem:[%s287 + $0x8] sm:$0xff] %v1457
        %1518 = vst [vmem:[%s287 + $0x10] sm:$0xff] %v1462
        %1519 = vst [vmem:[%s287 + $0x18] sm:$0xff] %v1465
        %1520 = vst [vmem:[%s287 + $0x20] sm:$0xff] %v1470
        %1521 = vst [vmem:[%s287 + $0x28] sm:$0xff] %v1473
        %1522 = vst [vmem:[%s287 + $0x30] sm:$0xff] %v1478
        %1523 = vst [vmem:[%s287 + $0x38] sm:$0xff] %v1481
        %1524 = vst [vmem:[%s287 + $0x40] sm:$0xff] %v1486
        %1525 = vst [vmem:[%s287 + $0x48] sm:$0xff] %v1489
        %1526 = vst [vmem:[%s287 + $0x50] sm:$0xff] %v1494
        %1527 = vst [vmem:[%s287 + $0x58] sm:$0xff] %v1497
        %1528 = vst [vmem:[%s287 + $0x60] sm:$0xff] %v1502
        %1529 = vst [vmem:[%s287 + $0x68] sm:$0xff] %v1505
        %1530 = vst [vmem:[%s287 + $0x70] sm:$0xff] %v1510
        %1531 = vst [vmem:[%s287 + $0x78] sm:$0xff] %v1513
        %s1532 = sand.u32 %s182, 1
        %s1533 = scalar_lea.sflag [#allocation4], %s1532
        %s1534 = sand.u32 %s182, 1
        %s1535 = smul.addr %s1534, 128
        %s1536 = scalar_lea.vmem [#allocation5], %s1535
        // Predicated region
        $region53: #{tpu_custom_call.1} parent=47 // pred_check
          %p1537 = pneg %p192
        $region54: #{tpu_custom_call.1} parent=47 // pred_check_branch
          %1539 = sbr.rel (%p1537) target = $region56
        $region55: #{tpu_custom_call.1} parent=47 // pred_region
          %s1540 = smul.u32 16, %s22
          %s1542 = ssub.s32 2048, 2048
          %1543 = vsyncadd %s1533, %s1542
          %s1544 = smul.addr %s1540, 128
          %s1545 = scalar_lea.hbm %s7, %s1544
          %s1546 = sshll.u32 %s1536, 4
          %s1547 = int_to_ptr.vmem [resolvable:$true] %s1546
          %1552 = dma.vmem_to_hbm [thread:$0]  %s1547, 2048, %s1545, %s1533, 128, 128, 8
        $region56: #{tpu_custom_call.1} parent=47 // pred_fallthru
          _
      $region48: #{tpu_custom_call.1} parent=5 // pred_fallthru
        _
      %p1553 = scmp.le.s32.totalorder 2, %s17
      // Predicated region
      $region57: #{tpu_custom_call.1} parent=5 // pred_check
        %p1554 = pneg %p1553
      $region58: #{tpu_custom_call.1} parent=5 // pred_check_branch
        %1556 = sbr.rel (%p1554) target = $region60
      $region59: #{tpu_custom_call.1} parent=5 // pred_region
        %s1557 = ssub.s32 %s17, 2
        // Predicated region
        $region61: #{tpu_custom_call.1} parent=59 // pred_check
          %p1558 = pneg %p198
        $region62: #{tpu_custom_call.1} parent=59 // pred_check_branch
          %1560 = sbr.rel (%p1558) target = $region64
        $region63: #{tpu_custom_call.1} parent=59 // pred_region
          %s1561 = sand.u32 %s183, 1
          %s1562 = scalar_lea.sflag [#allocation4], %s1561
          %s1563 = sand.u32 %s183, 1
          %s1564 = smul.addr %s1563, 128
          %s1565 = scalar_lea.vmem [#allocation5], %s1564
          %1566 = dma.done %s1562, 2048
        $region64: #{tpu_custom_call.1} parent=59 // pred_fallthru
          _
      $region60: #{tpu_custom_call.1} parent=5 // pred_fallthru
        _
    $region6: #{tpu_custom_call.1} parent=1 // loop_footer
      %s21 = sadd.s32 1, %s17
    $region7: #{tpu_custom_call.1} parent=1 // loop_footer_branch
      %16 = sbr.rel target = $region3
    $region8: #{tpu_custom_call.1} parent=1 // loop_exit
      _
    %1567 = vsyncpa [#allocation3], 1
    %s1568 = scalar_lea.sflag [#allocation3], 1
    %1569 = vsyncpa %s1568, 1
    %1570 = vsyncpa [#allocation4], 1
    %s1571 = scalar_lea.sflag [#allocation4], 1
    %1572 = vsyncpa %s1571, 1

</llo_original>
